<compile_context>
chip_gen: v6e
topology: v6e:2x2x1
jax: 0.10.0
libtpu: 0.0.40
codegen_flags: <defaults>
</compile_context>

<pallas_src>
import jax
import jax.numpy as jnp
from jax import lax
from jax.experimental import pallas as pl
from jax.experimental.pallas import tpu as pltpu


def _round_up(x, m):
    return ((x + m - 1) // m) * m


def _physical_vmem_bytes():
    # Hardware query with a conservative fallback (64 MiB == v7x per-core
    # physical VMEM, the smallest of the targeted chips), so a failed query can
    # only make the budget MORE conservative, never less.
    try:
        cap = int(pltpu.get_tpu_info().vmem_capacity_bytes)
        if cap > 0:
            return cap
    except Exception:  # hardware query unsupported on this backend/build
        pass
    return 64 * 1024 * 1024


def _gru_recurrence_kernel(seq_ref, gx_ref, bhn_ref, whh_hbm, out_ref,
                           whh_vmem, dma_sem):
    """One grid step == one (batch block, time chunk).

    seq_ref  : (Bt, 1)        int32  sequence lengths
    gx_ref   : (Tc, Bt, 3*Hp) bf16   x@W_ih^T + b_ih + [b_hr|b_hz|0], gates [r|z|n]
    bhn_ref  : (1, Hp)        f32    n-gate hidden bias (stays inside r*(...))
    whh_hbm  : (Hp, 3*Hp)     bf16   hidden->hidden weights in HBM (ANY space)
    out_ref  : (Bt, Hp)       f32    carried hidden state == returned hn
    whh_vmem : (Hp, 3*Hp)     bf16   single VMEM copy of W_hh (scratch)
    dma_sem  :                       DMA semaphore for the one-time weight copy
    """
    c = pl.program_id(1)                    # time-chunk index (serial axis)
    tc = gx_ref.shape[0]
    hp = out_ref.shape[-1]

    @pl.when(c == 0)
    def _():
        out_ref[...] = jnp.zeros_like(out_ref)
        cp = pltpu.make_async_copy(whh_hbm, whh_vmem, dma_sem)
        cp.start()
        cp.wait()

    # Chunk-invariant loads hoisted out of the timestep loop.
    seq = seq_ref[...]                      # (Bt, 1) int32
    whh = whh_vmem[...]                     # (Hp, 3Hp) bf16
    bhn = bhn_ref[...]                      # (1, Hp)  f32
    t0 = c * tc

    def step(i, h):
        gx = gx_ref[i]                      # (Bt, 3Hp) bf16, 128-aligned gate blocks
        # NOTE: h is cast to bf16 for the MXU; error accumulation over very long
        # sequences is bounded by the f32 accumulate + f32 gate math.
        gh = jnp.dot(h.astype(jnp.bfloat16), whh,
                     preferred_element_type=jnp.float32)       # (Bt, 3Hp) f32
        r = jax.nn.sigmoid(gx[:, :hp] + gh[:, :hp])
        z = jax.nn.sigmoid(gx[:, hp:2 * hp] + gh[:, hp:2 * hp])
        n = jnp.tanh(gx[:, 2 * hp:] + r * (gh[:, 2 * hp:] + bhn))
        h_new = (1.0 - z) * n + z * h
        # Rows past their sequence length freeze h; the frozen h at the end of
        # each row's sequence equals the hn the PyTorch module returns.
        keep = (t0 + i + 1) <= seq          # (Bt, 1) bool
        return jnp.where(keep, h_new, h)

    # Partial unroll: keeps LLO scheduling visibility without the vreg-spill
    # blow-up a full unroll of 32-64 steps would cause.
    out_ref[...] = lax.fori_loop(0, tc, step, out_ref[...],
                                 unroll=min(8, tc))


def rnn_context_pallas(x, seq_lengths, w_ih, w_hh, b_ih, b_hh,
                       *, time_chunk=32, batch_block=None):
    """x: (B, T, I), seq_lengths: (B,), weights as in torch.nn.GRUCell:
       w_ih (3H, I), w_hh (3H, H), b_ih (3H,), b_hh (3H,).  Returns hn (B, H) f32."""
    B, T, I = x.shape
    H = w_hh.shape[1]
    assert w_ih.shape == (3 * H, I)
    assert w_hh.shape == (3 * H, H)

    f32, bf16 = jnp.float32, jnp.bfloat16

    Hp = _round_up(H, 128)                  # lane-dense hidden dim
    Bp = _round_up(B, 16)                   # sublane-dense batch (bf16 packing)

    # Batch blocking: one block per core.  Only split when each half still
    # fills a 256-wide MXU (v7x two-core case); harmless on 1-TC chips.
    if batch_block is None:
        Bt = Bp // 2 if Bp >= 512 else Bp
    else:
        Bt = batch_block
    assert Bt % 8 == 0 and Bp % Bt == 0

    # --- VMEM-budget-driven time-chunk selection ------------------------------
    vmem_cap = _physical_vmem_bytes()
    budget = (vmem_cap * 3) // 4            # leave compiler headroom

    def _est(tc):
        return (2 * tc * Bt * 3 * Hp * 2    # gx chunk, bf16, double-buffered
                + Hp * 3 * Hp * 2           # W_hh VMEM scratch (single copy)
                + 2 * 8 * Hp * 4            # b_hn (sublane-padded)
                + 2 * Bt * 128 * 4          # seq lens (lane-padded)
                + 2 * Bt * Hp * 4)          # out block == h carry

    Tc = max(1, min(time_chunk, T))
    while Tc > 1 and _est(Tc) > budget:
        Tc //= 2
    Tp = _round_up(T, Tc)

    est = _est(Tc)
    vmem_limit = None
    if est > 12 * 1024 * 1024:              # default scoped limit is 16 MiB on v5e
        vmem_limit = min(int(est * 1.25) + (4 << 20), budget)

    # --- time-parallel input projection, emitted directly in kernel layout ----
    # W_ih (3H, I) -> (I, 3*Hp) gate-blocked; b_ih and the r/z parts of b_hh
    # are folded into gx so the kernel only adds the n-gate hidden bias.
    wih = jnp.transpose(w_ih.astype(f32).reshape(3, H, I), (2, 0, 1))  # (I,3,H)
    wih = jnp.pad(wih, ((0, 0), (0, 0), (0, Hp - H)))
    wih = wih.reshape(I, 3 * Hp).astype(bf16)

    b3 = b_ih.astype(f32).reshape(3, H) + jnp.concatenate(
        [b_hh.astype(f32).reshape(3, H)[:2], jnp.zeros((1, H), f32)], axis=0)
    b3 = jnp.pad(b3, ((0, 0), (0, Hp - H))).reshape(1, 1, 3 * Hp)

    xt = jnp.transpose(x.astype(bf16), (1, 0, 2))                    # (T, B, I)
    xt = jnp.pad(xt, ((0, Tp - T), (0, Bp - B), (0, 0)))             # (Tp, Bp, I)
    gx = lax.dot_general(xt, wih,
                         dimension_numbers=(((2,), (0,)), ((), ())),
                         preferred_element_type=f32)                 # (Tp,Bp,3Hp)
    gx = (gx + b3).astype(bf16)             # bf16 HBM stream for the recurrence

    # --- recurrent weights: (3H, H) -> (Hp, 3*Hp) bf16, per-gate blocks -------
    whh = jnp.transpose(w_hh.astype(f32).reshape(3, H, H), (2, 0, 1))  # (H,3,H)
    whh = jnp.pad(whh, ((0, Hp - H), (0, 0), (0, Hp - H)))
    whh = whh.reshape(Hp, 3 * Hp).astype(bf16)

    bhn = jnp.pad(b_hh.astype(f32)[2 * H:], (0, Hp - H)).reshape(1, Hp)

    seq = jnp.pad(seq_lengths.astype(jnp.int32), (0, Bp - B)).reshape(Bp, 1)

    grid = (Bp // Bt, Tp // Tc)

    cost = pl.CostEstimate(
        flops=int(2 * Tp * Bp * Hp * 3 * Hp + 12 * Tp * Bp * Hp),
        transcendentals=int(3 * Tp * Bp * Hp),
        bytes_accessed=int(gx.size * 2 + whh.size * 2
                           + Bp * Hp * 4 + Bp * 4 + Hp * 4),
    )

    grid_spec = pltpu.PrefetchScalarGridSpec(
        num_scalar_prefetch=0,
        grid=grid,
        in_specs=[
            pl.BlockSpec((Bt, 1), lambda b, c: (b, 0)),               # seq lens
            pl.BlockSpec((Tc, Bt, 3 * Hp), lambda b, c: (c, b, 0)),   # gx chunk (bf16)
            pl.BlockSpec((1, Hp), lambda b, c: (0, 0)),               # b_hn
            pl.BlockSpec(memory_space=pl.ANY),                        # W_hh stays in HBM
        ],
        out_specs=pl.BlockSpec((Bt, Hp), lambda b, c: (b, 0)),        # hn == h carry
        scratch_shapes=[
            pltpu.VMEM((Hp, 3 * Hp), bf16),                           # single W_hh copy
            pltpu.SemaphoreType.DMA,
        ],
    )

    hn = pl.pallas_call(
        _gru_recurrence_kernel,
        out_shape=jax.ShapeDtypeStruct((Bp, Hp), f32),
        grid_spec=grid_spec,
        compiler_params=pltpu.CompilerParams(
            dimension_semantics=("parallel", "arbitrary"),  # batch ||, time serial
            vmem_limit_bytes=vmem_limit),
        cost_estimate=cost,
    )(seq, gx, bhn, whh)

    return hn[:B, :H]


def rnn_context_ref(x, seq_lengths, w_ih, w_hh, b_ih, b_hh):
    """Pure-JAX (f32) reference matching the PyTorch forward exactly."""
    B, T, _ = x.shape
    H = w_hh.shape[1]
    h = jnp.zeros((B, H), jnp.float32)
    hn = jnp.zeros((B, H), jnp.float32)
    for t in range(T):
        xt = x[:, t, :]
        gx = xt @ w_ih.T + b_ih
        gh = h @ w_hh.T + b_hh
        r = jax.nn.sigmoid(gx[:, :H] + gh[:, :H])
        z = jax.nn.sigmoid(gx[:, H:2 * H] + gh[:, H:2 * H])
        n = jnp.tanh(gx[:, 2 * H:] + r * gh[:, 2 * H:])
        h = (1.0 - z) * n + z * h
        mask = (t + 1 <= seq_lengths).astype(jnp.float32)[:, None]
        hn = mask * h + (1.0 - mask) * hn
    return hn


if __name__ == "__main__":
    B, T, I, H = 2, 8, 4, 32

    key = jax.random.PRNGKey(0)
    k_x, k_wih, k_whh, k_bih, k_bhh = jax.random.split(key, 5)

    x = jax.random.normal(k_x, (B, T, I), dtype=jnp.float32)
    seq_lengths = jnp.array([5, 8], dtype=jnp.int32)

    # torch.nn.GRUCell init: uniform(-1/sqrt(H), 1/sqrt(H))
    bound = 1.0 / (H ** 0.5)
    w_ih = jax.random.uniform(k_wih, (3 * H, I), minval=-bound, maxval=bound)
    w_hh = jax.random.uniform(k_whh, (3 * H, H), minval=-bound, maxval=bound)
    b_ih = jax.random.uniform(k_bih, (3 * H,), minval=-bound, maxval=bound)
    b_hh = jax.random.uniform(k_bhh, (3 * H,), minval=-bound, maxval=bound)

    out = rnn_context_pallas(x, seq_lengths, w_ih, w_hh, b_ih, b_hh)
    out = jax.block_until_ready(out)

    ref = rnn_context_ref(x, seq_lengths, w_ih, w_hh, b_ih, b_hh)
    assert out.shape == (B, H)
    # bf16 MXU inputs / bf16 gx storage (f32 accumulation & gate math) ->
    # relaxed tolerance vs the f32 reference.
    assert jnp.allclose(out, ref, atol=3e-2, rtol=3e-2), "mismatch vs reference"

    print("KERNEL_OK")
</pallas_src>

<mosaic_0001>
module attributes {stable_mosaic.version = 11 : i64} {
  func.func @_gru_recurrence_kernel(%arg0: i32, %arg1: i32, %arg2: memref<16x1xi32, #tpu.memory_space<vmem>>, %arg3: memref<8x16x384xbf16, #tpu.memory_space<vmem>>, %arg4: memref<1x128xf32, #tpu.memory_space<vmem>>, %arg5: memref<128x384xbf16, #tpu.memory_space<any>>, %arg6: memref<16x128xf32, #tpu.memory_space<vmem>>, %arg7: memref<128x384xbf16, #tpu.memory_space<vmem>>, %arg8: memref<!tpu.dma_semaphore, #tpu.memory_space<semaphore_mem>>) attributes {dimension_semantics = [#tpu.dimension_semantics<parallel>, #tpu.dimension_semantics<arbitrary>], iteration_bounds = array<i64: 1, 1>, scalar_prefetch = 0 : i64, scratch_operands = 2 : i64, tpu.core_type = #tpu.core_type<tc>, window_params = [{transform_indices = @transform_0, window_bounds = array<i64: 16, 1>}, {transform_indices = @transform_1, window_bounds = array<i64: 8, 16, 384>}, {pipeline_mode = #tpu.pipeline_mode<synchronous>, transform_indices = @transform_2, window_bounds = array<i64: 1, 128>}, {}, {transform_indices = @transform_4, window_bounds = array<i64: 16, 128>}]} {
    %c0_i32 = arith.constant 0 : i32
    %0 = arith.cmpi eq, %arg1, %c0_i32 : i32
    %1 = arith.extui %0 : i1 to i32
    %c0_i32_0 = arith.constant 0 : i32
    %2 = arith.cmpi ne, %1, %c0_i32_0 : i32
    scf.if %2 {
      %cst_67 = arith.constant 0.000000e+00 : f32
      %353 = vector.broadcast %cst_67 : f32 to vector<16x128xf32>
      %c0_68 = arith.constant 0 : index
      %c0_69 = arith.constant 0 : index
      %354 = vector.load %arg6[%c0_68, %c0_69] : memref<16x128xf32, #tpu.memory_space<vmem>>, vector<16x128xf32>
      tpu.vector_store %arg6[%c0_68, %c0_69], %353 {strides = array<i32>} : memref<16x128xf32, #tpu.memory_space<vmem>>, vector<16x128xf32>,
      tpu.enqueue_dma source(%arg5 : memref<128x384xbf16, #tpu.memory_space<any>>) target(%arg7 : memref<128x384xbf16, #tpu.memory_space<vmem>>) target_semaphore(%arg8 : memref<!tpu.dma_semaphore, #tpu.memory_space<semaphore_mem>>)
      tpu.wait_dma2 semaphore(%arg8 : memref<!tpu.dma_semaphore, #tpu.memory_space<semaphore_mem>>) src(%arg5 : memref<128x384xbf16, #tpu.memory_space<any>>) dst(%arg7 : memref<128x384xbf16, #tpu.memory_space<vmem>>)
    } else {
    }
    %c0 = arith.constant 0 : index
    %c0_1 = arith.constant 0 : index
    %3 = vector.load %arg2[%c0, %c0_1] : memref<16x1xi32, #tpu.memory_space<vmem>>, vector<16x1xi32>
    %c0_2 = arith.constant 0 : index
    %c0_3 = arith.constant 0 : index
    %4 = vector.load %arg7[%c0_2, %c0_3] : memref<128x384xbf16, #tpu.memory_space<vmem>>, vector<128x384xbf16>
    %c0_4 = arith.constant 0 : index
    %c0_5 = arith.constant 0 : index
    %5 = vector.load %arg4[%c0_4, %c0_5] : memref<1x128xf32, #tpu.memory_space<vmem>>, vector<1x128xf32>
    %c8_i32 = arith.constant 8 : i32
    %6 = arith.muli %arg1, %c8_i32 : i32
    %c0_6 = arith.constant 0 : index
    %c0_7 = arith.constant 0 : index
    %7 = vector.load %arg6[%c0_6, %c0_7] : memref<16x128xf32, #tpu.memory_space<vmem>>, vector<16x128xf32>
    %c0_i32_8 = arith.constant 0 : i32
    %8 = arith.index_cast %c0_i32_8 : i32 to index
    %c0_9 = arith.constant 0 : index
    %c0_10 = arith.constant 0 : index
    %9 = vector.load %arg3[%8, %c0_9, %c0_10] : memref<8x16x384xbf16, #tpu.memory_space<vmem>>, vector<1x16x384xbf16>
    %10 = vector.shape_cast %9 : vector<1x16x384xbf16> to vector<16x384xbf16>
    %11 = arith.truncf %7 : vector<16x128xf32> to vector<16x128xbf16>
    %cst = arith.constant dense<0.000000e+00> : vector<16x384xf32>
    %12 = tpu.matmul %11, %4, %cst {dimension_numbers = #tpu.dot_dimension_numbers<[1], [0], [0], [1], [0, 0, 1, 1], [], []>} : vector<16x128xbf16>, vector<128x384xbf16>, vector<16x384xf32> -> vector<16x384xf32>
    %13 = vector.extract_strided_slice %10 {offsets = [0, 0], sizes = [16, 128], strides = [1, 1]} : vector<16x384xbf16> to vector<16x128xbf16>
    %14 = vector.extract_strided_slice %12 {offsets = [0, 0], sizes = [16, 128], strides = [1, 1]} : vector<16x384xf32> to vector<16x128xf32>
    %15 = arith.extf %13 : vector<16x128xbf16> to vector<16x128xf32>
    %16 = arith.addf %15, %14 : vector<16x128xf32>
    %17 = arith.negf %16 : vector<16x128xf32>
    %18 = math.exp %17 : vector<16x128xf32>
    %cst_11 = arith.constant 1.000000e+00 : f32
    %19 = vector.broadcast %cst_11 : f32 to vector<16x128xf32>
    %20 = arith.addf %19, %18 : vector<16x128xf32>
    %21 = arith.divf %19, %20 : vector<16x128xf32>
    %22 = vector.extract_strided_slice %10 {offsets = [0, 128], sizes = [16, 128], strides = [1, 1]} : vector<16x384xbf16> to vector<16x128xbf16>
    %23 = vector.extract_strided_slice %12 {offsets = [0, 128], sizes = [16, 128], strides = [1, 1]} : vector<16x384xf32> to vector<16x128xf32>
    %24 = arith.extf %22 : vector<16x128xbf16> to vector<16x128xf32>
    %25 = arith.addf %24, %23 : vector<16x128xf32>
    %26 = arith.negf %25 : vector<16x128xf32>
    %27 = math.exp %26 : vector<16x128xf32>
    %cst_12 = arith.constant 1.000000e+00 : f32
    %28 = vector.broadcast %cst_12 : f32 to vector<16x128xf32>
    %29 = arith.addf %28, %27 : vector<16x128xf32>
    %30 = arith.divf %28, %29 : vector<16x128xf32>
    %31 = vector.extract_strided_slice %10 {offsets = [0, 256], sizes = [16, 128], strides = [1, 1]} : vector<16x384xbf16> to vector<16x128xbf16>
    %32 = vector.extract_strided_slice %12 {offsets = [0, 256], sizes = [16, 128], strides = [1, 1]} : vector<16x384xf32> to vector<16x128xf32>
    %33 = vector.broadcast %5 : vector<1x128xf32> to vector<16x128xf32>
    %34 = arith.addf %32, %33 : vector<16x128xf32>
    %35 = arith.mulf %21, %34 : vector<16x128xf32>
    %36 = arith.extf %31 : vector<16x128xbf16> to vector<16x128xf32>
    %37 = arith.addf %36, %35 : vector<16x128xf32>
    %38 = math.tanh %37 : vector<16x128xf32>
    %cst_13 = arith.constant 1.000000e+00 : f32
    %39 = vector.broadcast %cst_13 : f32 to vector<16x128xf32>
    %40 = arith.subf %39, %30 : vector<16x128xf32>
    %41 = arith.mulf %40, %38 : vector<16x128xf32>
    %42 = arith.mulf %30, %7 : vector<16x128xf32>
    %43 = arith.addf %41, %42 : vector<16x128xf32>
    %44 = arith.addi %6, %c0_i32_8 : i32
    %c1_i32 = arith.constant 1 : i32
    %45 = arith.addi %44, %c1_i32 : i32
    %46 = vector.broadcast %45 : i32 to vector<16x1xi32>
    %47 = arith.cmpi sle, %46, %3 : vector<16x1xi32>
    %48 = vector.shape_cast %47 : vector<16x1xi1> to vector<16x1xi1>
    %49 = vector.broadcast %48 : vector<16x1xi1> to vector<16x128xi1>
    %50 = arith.select %49, %43, %7 : vector<16x128xi1>, vector<16x128xf32>
    %c1_i32_14 = arith.constant 1 : i32
    %51 = arith.index_cast %c1_i32_14 : i32 to index
    %c0_15 = arith.constant 0 : index
    %c0_16 = arith.constant 0 : index
    %52 = vector.load %arg3[%51, %c0_15, %c0_16] : memref<8x16x384xbf16, #tpu.memory_space<vmem>>, vector<1x16x384xbf16>
    %53 = vector.shape_cast %52 : vector<1x16x384xbf16> to vector<16x384xbf16>
    %54 = arith.truncf %50 : vector<16x128xf32> to vector<16x128xbf16>
    %cst_17 = arith.constant dense<0.000000e+00> : vector<16x384xf32>
    %55 = tpu.matmul %54, %4, %cst_17 {dimension_numbers = #tpu.dot_dimension_numbers<[1], [0], [0], [1], [0, 0, 1, 1], [], []>} : vector<16x128xbf16>, vector<128x384xbf16>, vector<16x384xf32> -> vector<16x384xf32>
    %56 = vector.extract_strided_slice %53 {offsets = [0, 0], sizes = [16, 128], strides = [1, 1]} : vector<16x384xbf16> to vector<16x128xbf16>
    %57 = vector.extract_strided_slice %55 {offsets = [0, 0], sizes = [16, 128], strides = [1, 1]} : vector<16x384xf32> to vector<16x128xf32>
    %58 = arith.extf %56 : vector<16x128xbf16> to vector<16x128xf32>
    %59 = arith.addf %58, %57 : vector<16x128xf32>
    %60 = arith.negf %59 : vector<16x128xf32>
    %61 = math.exp %60 : vector<16x128xf32>
    %cst_18 = arith.constant 1.000000e+00 : f32
    %62 = vector.broadcast %cst_18 : f32 to vector<16x128xf32>
    %63 = arith.addf %62, %61 : vector<16x128xf32>
    %64 = arith.divf %62, %63 : vector<16x128xf32>
    %65 = vector.extract_strided_slice %53 {offsets = [0, 128], sizes = [16, 128], strides = [1, 1]} : vector<16x384xbf16> to vector<16x128xbf16>
    %66 = vector.extract_strided_slice %55 {offsets = [0, 128], sizes = [16, 128], strides = [1, 1]} : vector<16x384xf32> to vector<16x128xf32>
    %67 = arith.extf %65 : vector<16x128xbf16> to vector<16x128xf32>
    %68 = arith.addf %67, %66 : vector<16x128xf32>
    %69 = arith.negf %68 : vector<16x128xf32>
    %70 = math.exp %69 : vector<16x128xf32>
    %cst_19 = arith.constant 1.000000e+00 : f32
    %71 = vector.broadcast %cst_19 : f32 to vector<16x128xf32>
    %72 = arith.addf %71, %70 : vector<16x128xf32>
    %73 = arith.divf %71, %72 : vector<16x128xf32>
    %74 = vector.extract_strided_slice %53 {offsets = [0, 256], sizes = [16, 128], strides = [1, 1]} : vector<16x384xbf16> to vector<16x128xbf16>
    %75 = vector.extract_strided_slice %55 {offsets = [0, 256], sizes = [16, 128], strides = [1, 1]} : vector<16x384xf32> to vector<16x128xf32>
    %76 = vector.broadcast %5 : vector<1x128xf32> to vector<16x128xf32>
    %77 = arith.addf %75, %76 : vector<16x128xf32>
    %78 = arith.mulf %64, %77 : vector<16x128xf32>
    %79 = arith.extf %74 : vector<16x128xbf16> to vector<16x128xf32>
    %80 = arith.addf %79, %78 : vector<16x128xf32>
    %81 = math.tanh %80 : vector<16x128xf32>
    %cst_20 = arith.constant 1.000000e+00 : f32
    %82 = vector.broadcast %cst_20 : f32 to vector<16x128xf32>
    %83 = arith.subf %82, %73 : vector<16x128xf32>
    %84 = arith.mulf %83, %81 : vector<16x128xf32>
    %85 = arith.mulf %73, %50 : vector<16x128xf32>
    %86 = arith.addf %84, %85 : vector<16x128xf32>
    %87 = arith.addi %6, %c1_i32_14 : i32
    %c1_i32_21 = arith.constant 1 : i32
    %88 = arith.addi %87, %c1_i32_21 : i32
    %89 = vector.broadcast %88 : i32 to vector<16x1xi32>
    %90 = arith.cmpi sle, %89, %3 : vector<16x1xi32>
    %91 = vector.shape_cast %90 : vector<16x1xi1> to vector<16x1xi1>
    %92 = vector.broadcast %91 : vector<16x1xi1> to vector<16x128xi1>
    %93 = arith.select %92, %86, %50 : vector<16x128xi1>, vector<16x128xf32>
    %c2_i32 = arith.constant 2 : i32
    %94 = arith.index_cast %c2_i32 : i32 to index
    %c0_22 = arith.constant 0 : index
    %c0_23 = arith.constant 0 : index
    %95 = vector.load %arg3[%94, %c0_22, %c0_23] : memref<8x16x384xbf16, #tpu.memory_space<vmem>>, vector<1x16x384xbf16>
    %96 = vector.shape_cast %95 : vector<1x16x384xbf16> to vector<16x384xbf16>
    %97 = arith.truncf %93 : vector<16x128xf32> to vector<16x128xbf16>
    %cst_24 = arith.constant dense<0.000000e+00> : vector<16x384xf32>
    %98 = tpu.matmul %97, %4, %cst_24 {dimension_numbers = #tpu.dot_dimension_numbers<[1], [0], [0], [1], [0, 0, 1, 1], [], []>} : vector<16x128xbf16>, vector<128x384xbf16>, vector<16x384xf32> -> vector<16x384xf32>
    %99 = vector.extract_strided_slice %96 {offsets = [0, 0], sizes = [16, 128], strides = [1, 1]} : vector<16x384xbf16> to vector<16x128xbf16>
    %100 = vector.extract_strided_slice %98 {offsets = [0, 0], sizes = [16, 128], strides = [1, 1]} : vector<16x384xf32> to vector<16x128xf32>
    %101 = arith.extf %99 : vector<16x128xbf16> to vector<16x128xf32>
    %102 = arith.addf %101, %100 : vector<16x128xf32>
    %103 = arith.negf %102 : vector<16x128xf32>
    %104 = math.exp %103 : vector<16x128xf32>
    %cst_25 = arith.constant 1.000000e+00 : f32
    %105 = vector.broadcast %cst_25 : f32 to vector<16x128xf32>
    %106 = arith.addf %105, %104 : vector<16x128xf32>
    %107 = arith.divf %105, %106 : vector<16x128xf32>
    %108 = vector.extract_strided_slice %96 {offsets = [0, 128], sizes = [16, 128], strides = [1, 1]} : vector<16x384xbf16> to vector<16x128xbf16>
    %109 = vector.extract_strided_slice %98 {offsets = [0, 128], sizes = [16, 128], strides = [1, 1]} : vector<16x384xf32> to vector<16x128xf32>
    %110 = arith.extf %108 : vector<16x128xbf16> to vector<16x128xf32>
    %111 = arith.addf %110, %109 : vector<16x128xf32>
    %112 = arith.negf %111 : vector<16x128xf32>
    %113 = math.exp %112 : vector<16x128xf32>
    %cst_26 = arith.constant 1.000000e+00 : f32
    %114 = vector.broadcast %cst_26 : f32 to vector<16x128xf32>
    %115 = arith.addf %114, %113 : vector<16x128xf32>
    %116 = arith.divf %114, %115 : vector<16x128xf32>
    %117 = vector.extract_strided_slice %96 {offsets = [0, 256], sizes = [16, 128], strides = [1, 1]} : vector<16x384xbf16> to vector<16x128xbf16>
    %118 = vector.extract_strided_slice %98 {offsets = [0, 256], sizes = [16, 128], strides = [1, 1]} : vector<16x384xf32> to vector<16x128xf32>
    %119 = vector.broadcast %5 : vector<1x128xf32> to vector<16x128xf32>
    %120 = arith.addf %118, %119 : vector<16x128xf32>
    %121 = arith.mulf %107, %120 : vector<16x128xf32>
    %122 = arith.extf %117 : vector<16x128xbf16> to vector<16x128xf32>
    %123 = arith.addf %122, %121 : vector<16x128xf32>
    %124 = math.tanh %123 : vector<16x128xf32>
    %cst_27 = arith.constant 1.000000e+00 : f32
    %125 = vector.broadcast %cst_27 : f32 to vector<16x128xf32>
    %126 = arith.subf %125, %116 : vector<16x128xf32>
    %127 = arith.mulf %126, %124 : vector<16x128xf32>
    %128 = arith.mulf %116, %93 : vector<16x128xf32>
    %129 = arith.addf %127, %128 : vector<16x128xf32>
    %130 = arith.addi %6, %c2_i32 : i32
    %c1_i32_28 = arith.constant 1 : i32
    %131 = arith.addi %130, %c1_i32_28 : i32
    %132 = vector.broadcast %131 : i32 to vector<16x1xi32>
    %133 = arith.cmpi sle, %132, %3 : vector<16x1xi32>
    %134 = vector.shape_cast %133 : vector<16x1xi1> to vector<16x1xi1>
    %135 = vector.broadcast %134 : vector<16x1xi1> to vector<16x128xi1>
    %136 = arith.select %135, %129, %93 : vector<16x128xi1>, vector<16x128xf32>
    %c3_i32 = arith.constant 3 : i32
    %137 = arith.index_cast %c3_i32 : i32 to index
    %c0_29 = arith.constant 0 : index
    %c0_30 = arith.constant 0 : index
    %138 = vector.load %arg3[%137, %c0_29, %c0_30] : memref<8x16x384xbf16, #tpu.memory_space<vmem>>, vector<1x16x384xbf16>
    %139 = vector.shape_cast %138 : vector<1x16x384xbf16> to vector<16x384xbf16>
    %140 = arith.truncf %136 : vector<16x128xf32> to vector<16x128xbf16>
    %cst_31 = arith.constant dense<0.000000e+00> : vector<16x384xf32>
    %141 = tpu.matmul %140, %4, %cst_31 {dimension_numbers = #tpu.dot_dimension_numbers<[1], [0], [0], [1], [0, 0, 1, 1], [], []>} : vector<16x128xbf16>, vector<128x384xbf16>, vector<16x384xf32> -> vector<16x384xf32>
    %142 = vector.extract_strided_slice %139 {offsets = [0, 0], sizes = [16, 128], strides = [1, 1]} : vector<16x384xbf16> to vector<16x128xbf16>
    %143 = vector.extract_strided_slice %141 {offsets = [0, 0], sizes = [16, 128], strides = [1, 1]} : vector<16x384xf32> to vector<16x128xf32>
    %144 = arith.extf %142 : vector<16x128xbf16> to vector<16x128xf32>
    %145 = arith.addf %144, %143 : vector<16x128xf32>
    %146 = arith.negf %145 : vector<16x128xf32>
    %147 = math.exp %146 : vector<16x128xf32>
    %cst_32 = arith.constant 1.000000e+00 : f32
    %148 = vector.broadcast %cst_32 : f32 to vector<16x128xf32>
    %149 = arith.addf %148, %147 : vector<16x128xf32>
    %150 = arith.divf %148, %149 : vector<16x128xf32>
    %151 = vector.extract_strided_slice %139 {offsets = [0, 128], sizes = [16, 128], strides = [1, 1]} : vector<16x384xbf16> to vector<16x128xbf16>
    %152 = vector.extract_strided_slice %141 {offsets = [0, 128], sizes = [16, 128], strides = [1, 1]} : vector<16x384xf32> to vector<16x128xf32>
    %153 = arith.extf %151 : vector<16x128xbf16> to vector<16x128xf32>
    %154 = arith.addf %153, %152 : vector<16x128xf32>
    %155 = arith.negf %154 : vector<16x128xf32>
    %156 = math.exp %155 : vector<16x128xf32>
    %cst_33 = arith.constant 1.000000e+00 : f32
    %157 = vector.broadcast %cst_33 : f32 to vector<16x128xf32>
    %158 = arith.addf %157, %156 : vector<16x128xf32>
    %159 = arith.divf %157, %158 : vector<16x128xf32>
    %160 = vector.extract_strided_slice %139 {offsets = [0, 256], sizes = [16, 128], strides = [1, 1]} : vector<16x384xbf16> to vector<16x128xbf16>
    %161 = vector.extract_strided_slice %141 {offsets = [0, 256], sizes = [16, 128], strides = [1, 1]} : vector<16x384xf32> to vector<16x128xf32>
    %162 = vector.broadcast %5 : vector<1x128xf32> to vector<16x128xf32>
    %163 = arith.addf %161, %162 : vector<16x128xf32>
    %164 = arith.mulf %150, %163 : vector<16x128xf32>
    %165 = arith.extf %160 : vector<16x128xbf16> to vector<16x128xf32>
    %166 = arith.addf %165, %164 : vector<16x128xf32>
    %167 = math.tanh %166 : vector<16x128xf32>
    %cst_34 = arith.constant 1.000000e+00 : f32
    %168 = vector.broadcast %cst_34 : f32 to vector<16x128xf32>
    %169 = arith.subf %168, %159 : vector<16x128xf32>
    %170 = arith.mulf %169, %167 : vector<16x128xf32>
    %171 = arith.mulf %159, %136 : vector<16x128xf32>
    %172 = arith.addf %170, %171 : vector<16x128xf32>
    %173 = arith.addi %6, %c3_i32 : i32
    %c1_i32_35 = arith.constant 1 : i32
    %174 = arith.addi %173, %c1_i32_35 : i32
    %175 = vector.broadcast %174 : i32 to vector<16x1xi32>
    %176 = arith.cmpi sle, %175, %3 : vector<16x1xi32>
    %177 = vector.shape_cast %176 : vector<16x1xi1> to vector<16x1xi1>
    %178 = vector.broadcast %177 : vector<16x1xi1> to vector<16x128xi1>
    %179 = arith.select %178, %172, %136 : vector<16x128xi1>, vector<16x128xf32>
    %c4_i32 = arith.constant 4 : i32
    %180 = arith.index_cast %c4_i32 : i32 to index
    %c0_36 = arith.constant 0 : index
    %c0_37 = arith.constant 0 : index
    %181 = vector.load %arg3[%180, %c0_36, %c0_37] : memref<8x16x384xbf16, #tpu.memory_space<vmem>>, vector<1x16x384xbf16>
    %182 = vector.shape_cast %181 : vector<1x16x384xbf16> to vector<16x384xbf16>
    %183 = arith.truncf %179 : vector<16x128xf32> to vector<16x128xbf16>
    %cst_38 = arith.constant dense<0.000000e+00> : vector<16x384xf32>
    %184 = tpu.matmul %183, %4, %cst_38 {dimension_numbers = #tpu.dot_dimension_numbers<[1], [0], [0], [1], [0, 0, 1, 1], [], []>} : vector<16x128xbf16>, vector<128x384xbf16>, vector<16x384xf32> -> vector<16x384xf32>
    %185 = vector.extract_strided_slice %182 {offsets = [0, 0], sizes = [16, 128], strides = [1, 1]} : vector<16x384xbf16> to vector<16x128xbf16>
    %186 = vector.extract_strided_slice %184 {offsets = [0, 0], sizes = [16, 128], strides = [1, 1]} : vector<16x384xf32> to vector<16x128xf32>
    %187 = arith.extf %185 : vector<16x128xbf16> to vector<16x128xf32>
    %188 = arith.addf %187, %186 : vector<16x128xf32>
    %189 = arith.negf %188 : vector<16x128xf32>
    %190 = math.exp %189 : vector<16x128xf32>
    %cst_39 = arith.constant 1.000000e+00 : f32
    %191 = vector.broadcast %cst_39 : f32 to vector<16x128xf32>
    %192 = arith.addf %191, %190 : vector<16x128xf32>
    %193 = arith.divf %191, %192 : vector<16x128xf32>
    %194 = vector.extract_strided_slice %182 {offsets = [0, 128], sizes = [16, 128], strides = [1, 1]} : vector<16x384xbf16> to vector<16x128xbf16>
    %195 = vector.extract_strided_slice %184 {offsets = [0, 128], sizes = [16, 128], strides = [1, 1]} : vector<16x384xf32> to vector<16x128xf32>
    %196 = arith.extf %194 : vector<16x128xbf16> to vector<16x128xf32>
    %197 = arith.addf %196, %195 : vector<16x128xf32>
    %198 = arith.negf %197 : vector<16x128xf32>
    %199 = math.exp %198 : vector<16x128xf32>
    %cst_40 = arith.constant 1.000000e+00 : f32
    %200 = vector.broadcast %cst_40 : f32 to vector<16x128xf32>
    %201 = arith.addf %200, %199 : vector<16x128xf32>
    %202 = arith.divf %200, %201 : vector<16x128xf32>
    %203 = vector.extract_strided_slice %182 {offsets = [0, 256], sizes = [16, 128], strides = [1, 1]} : vector<16x384xbf16> to vector<16x128xbf16>
    %204 = vector.extract_strided_slice %184 {offsets = [0, 256], sizes = [16, 128], strides = [1, 1]} : vector<16x384xf32> to vector<16x128xf32>
    %205 = vector.broadcast %5 : vector<1x128xf32> to vector<16x128xf32>
    %206 = arith.addf %204, %205 : vector<16x128xf32>
    %207 = arith.mulf %193, %206 : vector<16x128xf32>
    %208 = arith.extf %203 : vector<16x128xbf16> to vector<16x128xf32>
    %209 = arith.addf %208, %207 : vector<16x128xf32>
    %210 = math.tanh %209 : vector<16x128xf32>
    %cst_41 = arith.constant 1.000000e+00 : f32
    %211 = vector.broadcast %cst_41 : f32 to vector<16x128xf32>
    %212 = arith.subf %211, %202 : vector<16x128xf32>
    %213 = arith.mulf %212, %210 : vector<16x128xf32>
    %214 = arith.mulf %202, %179 : vector<16x128xf32>
    %215 = arith.addf %213, %214 : vector<16x128xf32>
    %216 = arith.addi %6, %c4_i32 : i32
    %c1_i32_42 = arith.constant 1 : i32
    %217 = arith.addi %216, %c1_i32_42 : i32
    %218 = vector.broadcast %217 : i32 to vector<16x1xi32>
    %219 = arith.cmpi sle, %218, %3 : vector<16x1xi32>
    %220 = vector.shape_cast %219 : vector<16x1xi1> to vector<16x1xi1>
    %221 = vector.broadcast %220 : vector<16x1xi1> to vector<16x128xi1>
    %222 = arith.select %221, %215, %179 : vector<16x128xi1>, vector<16x128xf32>
    %c5_i32 = arith.constant 5 : i32
    %223 = arith.index_cast %c5_i32 : i32 to index
    %c0_43 = arith.constant 0 : index
    %c0_44 = arith.constant 0 : index
    %224 = vector.load %arg3[%223, %c0_43, %c0_44] : memref<8x16x384xbf16, #tpu.memory_space<vmem>>, vector<1x16x384xbf16>
    %225 = vector.shape_cast %224 : vector<1x16x384xbf16> to vector<16x384xbf16>
    %226 = arith.truncf %222 : vector<16x128xf32> to vector<16x128xbf16>
    %cst_45 = arith.constant dense<0.000000e+00> : vector<16x384xf32>
    %227 = tpu.matmul %226, %4, %cst_45 {dimension_numbers = #tpu.dot_dimension_numbers<[1], [0], [0], [1], [0, 0, 1, 1], [], []>} : vector<16x128xbf16>, vector<128x384xbf16>, vector<16x384xf32> -> vector<16x384xf32>
    %228 = vector.extract_strided_slice %225 {offsets = [0, 0], sizes = [16, 128], strides = [1, 1]} : vector<16x384xbf16> to vector<16x128xbf16>
    %229 = vector.extract_strided_slice %227 {offsets = [0, 0], sizes = [16, 128], strides = [1, 1]} : vector<16x384xf32> to vector<16x128xf32>
    %230 = arith.extf %228 : vector<16x128xbf16> to vector<16x128xf32>
    %231 = arith.addf %230, %229 : vector<16x128xf32>
    %232 = arith.negf %231 : vector<16x128xf32>
    %233 = math.exp %232 : vector<16x128xf32>
    %cst_46 = arith.constant 1.000000e+00 : f32
    %234 = vector.broadcast %cst_46 : f32 to vector<16x128xf32>
    %235 = arith.addf %234, %233 : vector<16x128xf32>
    %236 = arith.divf %234, %235 : vector<16x128xf32>
    %237 = vector.extract_strided_slice %225 {offsets = [0, 128], sizes = [16, 128], strides = [1, 1]} : vector<16x384xbf16> to vector<16x128xbf16>
    %238 = vector.extract_strided_slice %227 {offsets = [0, 128], sizes = [16, 128], strides = [1, 1]} : vector<16x384xf32> to vector<16x128xf32>
    %239 = arith.extf %237 : vector<16x128xbf16> to vector<16x128xf32>
    %240 = arith.addf %239, %238 : vector<16x128xf32>
    %241 = arith.negf %240 : vector<16x128xf32>
    %242 = math.exp %241 : vector<16x128xf32>
    %cst_47 = arith.constant 1.000000e+00 : f32
    %243 = vector.broadcast %cst_47 : f32 to vector<16x128xf32>
    %244 = arith.addf %243, %242 : vector<16x128xf32>
    %245 = arith.divf %243, %244 : vector<16x128xf32>
    %246 = vector.extract_strided_slice %225 {offsets = [0, 256], sizes = [16, 128], strides = [1, 1]} : vector<16x384xbf16> to vector<16x128xbf16>
    %247 = vector.extract_strided_slice %227 {offsets = [0, 256], sizes = [16, 128], strides = [1, 1]} : vector<16x384xf32> to vector<16x128xf32>
    %248 = vector.broadcast %5 : vector<1x128xf32> to vector<16x128xf32>
    %249 = arith.addf %247, %248 : vector<16x128xf32>
    %250 = arith.mulf %236, %249 : vector<16x128xf32>
    %251 = arith.extf %246 : vector<16x128xbf16> to vector<16x128xf32>
    %252 = arith.addf %251, %250 : vector<16x128xf32>
    %253 = math.tanh %252 : vector<16x128xf32>
    %cst_48 = arith.constant 1.000000e+00 : f32
    %254 = vector.broadcast %cst_48 : f32 to vector<16x128xf32>
    %255 = arith.subf %254, %245 : vector<16x128xf32>
    %256 = arith.mulf %255, %253 : vector<16x128xf32>
    %257 = arith.mulf %245, %222 : vector<16x128xf32>
    %258 = arith.addf %256, %257 : vector<16x128xf32>
    %259 = arith.addi %6, %c5_i32 : i32
    %c1_i32_49 = arith.constant 1 : i32
    %260 = arith.addi %259, %c1_i32_49 : i32
    %261 = vector.broadcast %260 : i32 to vector<16x1xi32>
    %262 = arith.cmpi sle, %261, %3 : vector<16x1xi32>
    %263 = vector.shape_cast %262 : vector<16x1xi1> to vector<16x1xi1>
    %264 = vector.broadcast %263 : vector<16x1xi1> to vector<16x128xi1>
    %265 = arith.select %264, %258, %222 : vector<16x128xi1>, vector<16x128xf32>
    %c6_i32 = arith.constant 6 : i32
    %266 = arith.index_cast %c6_i32 : i32 to index
    %c0_50 = arith.constant 0 : index
    %c0_51 = arith.constant 0 : index
    %267 = vector.load %arg3[%266, %c0_50, %c0_51] : memref<8x16x384xbf16, #tpu.memory_space<vmem>>, vector<1x16x384xbf16>
    %268 = vector.shape_cast %267 : vector<1x16x384xbf16> to vector<16x384xbf16>
    %269 = arith.truncf %265 : vector<16x128xf32> to vector<16x128xbf16>
    %cst_52 = arith.constant dense<0.000000e+00> : vector<16x384xf32>
    %270 = tpu.matmul %269, %4, %cst_52 {dimension_numbers = #tpu.dot_dimension_numbers<[1], [0], [0], [1], [0, 0, 1, 1], [], []>} : vector<16x128xbf16>, vector<128x384xbf16>, vector<16x384xf32> -> vector<16x384xf32>
    %271 = vector.extract_strided_slice %268 {offsets = [0, 0], sizes = [16, 128], strides = [1, 1]} : vector<16x384xbf16> to vector<16x128xbf16>
    %272 = vector.extract_strided_slice %270 {offsets = [0, 0], sizes = [16, 128], strides = [1, 1]} : vector<16x384xf32> to vector<16x128xf32>
    %273 = arith.extf %271 : vector<16x128xbf16> to vector<16x128xf32>
    %274 = arith.addf %273, %272 : vector<16x128xf32>
    %275 = arith.negf %274 : vector<16x128xf32>
    %276 = math.exp %275 : vector<16x128xf32>
    %cst_53 = arith.constant 1.000000e+00 : f32
    %277 = vector.broadcast %cst_53 : f32 to vector<16x128xf32>
    %278 = arith.addf %277, %276 : vector<16x128xf32>
    %279 = arith.divf %277, %278 : vector<16x128xf32>
    %280 = vector.extract_strided_slice %268 {offsets = [0, 128], sizes = [16, 128], strides = [1, 1]} : vector<16x384xbf16> to vector<16x128xbf16>
    %281 = vector.extract_strided_slice %270 {offsets = [0, 128], sizes = [16, 128], strides = [1, 1]} : vector<16x384xf32> to vector<16x128xf32>
    %282 = arith.extf %280 : vector<16x128xbf16> to vector<16x128xf32>
    %283 = arith.addf %282, %281 : vector<16x128xf32>
    %284 = arith.negf %283 : vector<16x128xf32>
    %285 = math.exp %284 : vector<16x128xf32>
    %cst_54 = arith.constant 1.000000e+00 : f32
    %286 = vector.broadcast %cst_54 : f32 to vector<16x128xf32>
    %287 = arith.addf %286, %285 : vector<16x128xf32>
    %288 = arith.divf %286, %287 : vector<16x128xf32>
    %289 = vector.extract_strided_slice %268 {offsets = [0, 256], sizes = [16, 128], strides = [1, 1]} : vector<16x384xbf16> to vector<16x128xbf16>
    %290 = vector.extract_strided_slice %270 {offsets = [0, 256], sizes = [16, 128], strides = [1, 1]} : vector<16x384xf32> to vector<16x128xf32>
    %291 = vector.broadcast %5 : vector<1x128xf32> to vector<16x128xf32>
    %292 = arith.addf %290, %291 : vector<16x128xf32>
    %293 = arith.mulf %279, %292 : vector<16x128xf32>
    %294 = arith.extf %289 : vector<16x128xbf16> to vector<16x128xf32>
    %295 = arith.addf %294, %293 : vector<16x128xf32>
    %296 = math.tanh %295 : vector<16x128xf32>
    %cst_55 = arith.constant 1.000000e+00 : f32
    %297 = vector.broadcast %cst_55 : f32 to vector<16x128xf32>
    %298 = arith.subf %297, %288 : vector<16x128xf32>
    %299 = arith.mulf %298, %296 : vector<16x128xf32>
    %300 = arith.mulf %288, %265 : vector<16x128xf32>
    %301 = arith.addf %299, %300 : vector<16x128xf32>
    %302 = arith.addi %6, %c6_i32 : i32
    %c1_i32_56 = arith.constant 1 : i32
    %303 = arith.addi %302, %c1_i32_56 : i32
    %304 = vector.broadcast %303 : i32 to vector<16x1xi32>
    %305 = arith.cmpi sle, %304, %3 : vector<16x1xi32>
    %306 = vector.shape_cast %305 : vector<16x1xi1> to vector<16x1xi1>
    %307 = vector.broadcast %306 : vector<16x1xi1> to vector<16x128xi1>
    %308 = arith.select %307, %301, %265 : vector<16x128xi1>, vector<16x128xf32>
    %c7_i32 = arith.constant 7 : i32
    %309 = arith.index_cast %c7_i32 : i32 to index
    %c0_57 = arith.constant 0 : index
    %c0_58 = arith.constant 0 : index
    %310 = vector.load %arg3[%309, %c0_57, %c0_58] : memref<8x16x384xbf16, #tpu.memory_space<vmem>>, vector<1x16x384xbf16>
    %311 = vector.shape_cast %310 : vector<1x16x384xbf16> to vector<16x384xbf16>
    %312 = arith.truncf %308 : vector<16x128xf32> to vector<16x128xbf16>
    %cst_59 = arith.constant dense<0.000000e+00> : vector<16x384xf32>
    %313 = tpu.matmul %312, %4, %cst_59 {dimension_numbers = #tpu.dot_dimension_numbers<[1], [0], [0], [1], [0, 0, 1, 1], [], []>} : vector<16x128xbf16>, vector<128x384xbf16>, vector<16x384xf32> -> vector<16x384xf32>
    %314 = vector.extract_strided_slice %311 {offsets = [0, 0], sizes = [16, 128], strides = [1, 1]} : vector<16x384xbf16> to vector<16x128xbf16>
    %315 = vector.extract_strided_slice %313 {offsets = [0, 0], sizes = [16, 128], strides = [1, 1]} : vector<16x384xf32> to vector<16x128xf32>
    %316 = arith.extf %314 : vector<16x128xbf16> to vector<16x128xf32>
    %317 = arith.addf %316, %315 : vector<16x128xf32>
    %318 = arith.negf %317 : vector<16x128xf32>
    %319 = math.exp %318 : vector<16x128xf32>
    %cst_60 = arith.constant 1.000000e+00 : f32
    %320 = vector.broadcast %cst_60 : f32 to vector<16x128xf32>
    %321 = arith.addf %320, %319 : vector<16x128xf32>
    %322 = arith.divf %320, %321 : vector<16x128xf32>
    %323 = vector.extract_strided_slice %311 {offsets = [0, 128], sizes = [16, 128], strides = [1, 1]} : vector<16x384xbf16> to vector<16x128xbf16>
    %324 = vector.extract_strided_slice %313 {offsets = [0, 128], sizes = [16, 128], strides = [1, 1]} : vector<16x384xf32> to vector<16x128xf32>
    %325 = arith.extf %323 : vector<16x128xbf16> to vector<16x128xf32>
    %326 = arith.addf %325, %324 : vector<16x128xf32>
    %327 = arith.negf %326 : vector<16x128xf32>
    %328 = math.exp %327 : vector<16x128xf32>
    %cst_61 = arith.constant 1.000000e+00 : f32
    %329 = vector.broadcast %cst_61 : f32 to vector<16x128xf32>
    %330 = arith.addf %329, %328 : vector<16x128xf32>
    %331 = arith.divf %329, %330 : vector<16x128xf32>
    %332 = vector.extract_strided_slice %311 {offsets = [0, 256], sizes = [16, 128], strides = [1, 1]} : vector<16x384xbf16> to vector<16x128xbf16>
    %333 = vector.extract_strided_slice %313 {offsets = [0, 256], sizes = [16, 128], strides = [1, 1]} : vector<16x384xf32> to vector<16x128xf32>
    %334 = vector.broadcast %5 : vector<1x128xf32> to vector<16x128xf32>
    %335 = arith.addf %333, %334 : vector<16x128xf32>
    %336 = arith.mulf %322, %335 : vector<16x128xf32>
    %337 = arith.extf %332 : vector<16x128xbf16> to vector<16x128xf32>
    %338 = arith.addf %337, %336 : vector<16x128xf32>
    %339 = math.tanh %338 : vector<16x128xf32>
    %cst_62 = arith.constant 1.000000e+00 : f32
    %340 = vector.broadcast %cst_62 : f32 to vector<16x128xf32>
    %341 = arith.subf %340, %331 : vector<16x128xf32>
    %342 = arith.mulf %341, %339 : vector<16x128xf32>
    %343 = arith.mulf %331, %308 : vector<16x128xf32>
    %344 = arith.addf %342, %343 : vector<16x128xf32>
    %345 = arith.addi %6, %c7_i32 : i32
    %c1_i32_63 = arith.constant 1 : i32
    %346 = arith.addi %345, %c1_i32_63 : i32
    %347 = vector.broadcast %346 : i32 to vector<16x1xi32>
    %348 = arith.cmpi sle, %347, %3 : vector<16x1xi32>
    %349 = vector.shape_cast %348 : vector<16x1xi1> to vector<16x1xi1>
    %350 = vector.broadcast %349 : vector<16x1xi1> to vector<16x128xi1>
    %351 = arith.select %350, %344, %308 : vector<16x128xi1>, vector<16x128xf32>
    %c8_i32_64 = arith.constant 8 : i32
    %c0_65 = arith.constant 0 : index
    %c0_66 = arith.constant 0 : index
    %352 = vector.load %arg6[%c0_65, %c0_66] : memref<16x128xf32, #tpu.memory_space<vmem>>, vector<16x128xf32>
    tpu.vector_store %arg6[%c0_65, %c0_66], %351 {strides = array<i32>} : memref<16x128xf32, #tpu.memory_space<vmem>>, vector<16x128xf32>,
    return
  }
  func.func @transform_0(%arg0: i32, %arg1: i32) -> (i32, i32) {
    %c0_i32 = arith.constant 0 : i32
    %c0_i32_0 = arith.constant 0 : i32
    return %arg0, %c0_i32 : i32, i32
  }
  func.func @transform_1(%arg0: i32, %arg1: i32) -> (i32, i32, i32) {
    %c0_i32 = arith.constant 0 : i32
    %c0_i32_0 = arith.constant 0 : i32
    return %arg1, %arg0, %c0_i32 : i32, i32, i32
  }
  func.func @transform_2(%arg0: i32, %arg1: i32) -> (i32, i32) {
    %c0_i32 = arith.constant 0 : i32
    %c0_i32_0 = arith.constant 0 : i32
    %c0_i32_1 = arith.constant 0 : i32
    return %c0_i32, %c0_i32_0 : i32, i32
  }
  func.func @transform_4(%arg0: i32, %arg1: i32) -> (i32, i32) {
    %c0_i32 = arith.constant 0 : i32
    %c0_i32_0 = arith.constant 0 : i32
    return %arg0, %c0_i32 : i32, i32
  }
}

</mosaic_0001>

<llo_original>
// kernel: tpu_custom_call.1
$region0: #{tpu_custom_call.1}
  #allocation0 [shape = 'u32[]', space=smem, size = 0x4, offset = 0x4, fixed_abs, tag = 'smem constant byte address 0x4 - core index']
  #allocation1 [shape = 'u32[144,128]{1,0:T(1,128)}', space=vmem, size = 0x12000, scoped, tag = 'internal scratch']
  #allocation2 [shape = 'bf16[128,384]{1,0:T(8,128)(2,1)}', space=vmem, size = 0x18000, scoped, tag = 'scratch operand']
  #allocation3 [shape = 's32[1]{0}', space=sflag, size = 0x4, scoped, tag = 'scratch operand']
  #allocation8 [shape = 's32[]', space=sflag, size = 0x4, offset = 0, fixed_abs, tag = 'sflag constant byte address 0x0 - dummy sync flag']
  #allocation9 [shape = 's32[]', space=sflag, size = 0x4, offset = 0, fixed_abs, tag = 'sflag constant byte address 0x0 - dummy sync flag']
  #allocation10 [shape = 'u32[]', space=smem, size = 0x4, offset = 0x44, fixed_abs, tag = 'smem constant byte address 0x44 - assertion arg 0']
  #allocation11 [shape = 'u32[]', space=smem, size = 0x4, offset = 0x48, fixed_abs, tag = 'smem constant byte address 0x48 - assertion arg 1']
  %s0 = inlined_call_operand.vmem [shape: s32[16,1], index: 0, kind: input, shape index: {}]
  %s1 = inlined_call_operand.hbm [shape: bf16[8,16,384], index: 1, kind: input, shape index: {}]
  %s2 = inlined_call_operand.vmem [shape: f32[1,128], index: 2, kind: input, shape index: {}]
  %s3 = inlined_call_operand.hbm [shape: bf16[128,384], index: 3, kind: input, shape index: {}]
  %s4 = inlined_call_operand.hbm [shape: f32[16,128], index: 4, kind: output, shape index: {}]
  %s5 = sld [smem:[#allocation0]]
  $region34: #{tpu_custom_call.1} parent=0
    _
  %s7 = ssub.s32 1, %s5
  %s8 = scalar_select 0, %s7, %s5
  $region1: #{tpu_custom_call.1} parent=0
    #allocation4 [shape = 'u8[98304]{0}', space=vmem, size = 0x18000, scoped, tag = 'input window, operand 1, single buffered']
    #allocation5 [shape = 's32[1]{0}', space=sflag, size = 0x4, scoped, tag = 'scoped memory for tpu_custom_call.1']
    #allocation6 [shape = 's32[1]{0}', space=sflag, size = 0x4, scoped, tag = 'scoped memory for tpu_custom_call.1']
    #allocation7 [shape = 'u8[8192]{0}', space=vmem, size = 0x2000, scoped, tag = 'output window, operand 0, single buffered']
    %9 = vsyncpa [#allocation5], 0
    %10 = vsyncpa [#allocation6], 0
    // Predicated region
    $region2: #{tpu_custom_call.1} parent=1 // pred_check
      _
    $region3: #{tpu_custom_call.1} parent=1 // pred_check_branch
      %12 = sbr.rel (0) target = $region5
    $region4: #{tpu_custom_call.1} parent=1 // pred_region
      _
    $region5: #{tpu_custom_call.1} parent=1 // pred_fallthru
      _
    // Predicated region
    $region6: #{tpu_custom_call.1} parent=1 // pred_check
      _
    $region7: #{tpu_custom_call.1} parent=1 // pred_check_branch
      %14 = sbr.rel (0) target = $region9
    $region8: #{tpu_custom_call.1} parent=1 // pred_region
      %s16 = ssub.s32 3072, 3072
      %17 = vsyncadd [#allocation5], %s16
      %s18 = sshll.u32 [#allocation4], 4
      %s19 = int_to_ptr.vmem [resolvable:$true] %s18
      %24 = dma.hbm_to_vmem [thread:$0]  %s1, 3072, %s19, [#allocation5], 192, 192, 12
    $region9: #{tpu_custom_call.1} parent=1 // pred_fallthru
      _
    // Predicated region
    $region10: #{tpu_custom_call.1} parent=1 // pred_check
      _
    $region11: #{tpu_custom_call.1} parent=1 // pred_check_branch
      %26 = sbr.rel (0) target = $region13
    $region12: #{tpu_custom_call.1} parent=1 // pred_region
      _
    $region13: #{tpu_custom_call.1} parent=1 // pred_fallthru
      _
    // Predicated region
    $region14: #{tpu_custom_call.1} parent=1 // pred_check
      _
    $region15: #{tpu_custom_call.1} parent=1 // pred_check_branch
      %28 = sbr.rel (0) target = $region17
    $region16: #{tpu_custom_call.1} parent=1 // pred_region
      %29 = dma.done [#allocation5], 3072
    $region17: #{tpu_custom_call.1} parent=1 // pred_fallthru
      _
    %p31 = scmp.eq.s32.totalorder 0, 0
    // Predicated region
    $region18: #{tpu_custom_call.1} parent=1 // pred_check
      %p32 = pneg %p31
    $region19: #{tpu_custom_call.1} parent=1 // pred_check_branch
      %34 = sbr.rel (%p32) target = $region21
    $region20: #{tpu_custom_call.1} parent=1 // pred_region
      %35 = vst [vmem:[#allocation7] sm:$0xff] 0.0
      %36 = vst [vmem:[#allocation7 + $0x8] sm:$0xff] 0.0
      // Predicated region
      $region22: #{tpu_custom_call.1} parent=20 // pred_check
        _
      $region23: #{tpu_custom_call.1} parent=20 // pred_check_branch
        %38 = sbr.rel target = $region25
      $region24: #{tpu_custom_call.1} parent=20 // pred_region
        %39 = sst [smem:[#allocation10]] [#allocation9]
        %40 = sst [smem:[#allocation11]] [#allocation8]
      $region25: #{tpu_custom_call.1} parent=20 // pred_fallthru
        _
      %42 = shalt.err (0)
      %s44 = sshll.u32 [#allocation2], 4
      %s45 = int_to_ptr.vmem [resolvable:$true] %s44
      %47 = dma.hbm_to_vmem [thread:$0]  %s3, 3072, %s45, [#allocation3]
      %s48 = smul.u32 4, 16
      %s49 = smul.u32 %s48, 3
      %s50 = sshll.u32 %s49, 4
      %51 = dma.done [#allocation3], %s50
    $region21: #{tpu_custom_call.1} parent=1 // pred_fallthru
      _
    %v52 = vld [vmem:[%s0] sm:$0xff]
    %v53 = vld [vmem:[%s0 + $0x8] sm:$0xff]
    %v54 = vld [vmem:[#allocation2] sm:$0xff]
    %v55 = vld [vmem:[#allocation2 + $0x8] sm:$0xf]
    %v56 = vld [vmem:[#allocation2 + $0xc] sm:$0xff]
    %v57 = vld [vmem:[#allocation2 + $0x14] sm:$0xf]
    %v58 = vld [vmem:[#allocation2 + $0x18] sm:$0xff]
    %v59 = vld [vmem:[#allocation2 + $0x20] sm:$0xf]
    %v60 = vld [vmem:[#allocation2 + $0x24] sm:$0xff]
    %v61 = vld [vmem:[#allocation2 + $0x2c] sm:$0xf]
    %v62 = vld [vmem:[#allocation2 + $0x30] sm:$0xff]
    %v63 = vld [vmem:[#allocation2 + $0x38] sm:$0xf]
    %v64 = vld [vmem:[#allocation2 + $0x3c] sm:$0xff]
    %v65 = vld [vmem:[#allocation2 + $0x44] sm:$0xf]
    %v66 = vld [vmem:[#allocation2 + $0x48] sm:$0xff]
    %v67 = vld [vmem:[#allocation2 + $0x50] sm:$0xf]
    %v68 = vld [vmem:[#allocation2 + $0x54] sm:$0xff]
    %v69 = vld [vmem:[#allocation2 + $0x5c] sm:$0xf]
    %v70 = vld [vmem:[#allocation2 + $0x60] sm:$0xff]
    %v71 = vld [vmem:[#allocation2 + $0x68] sm:$0xf]
    %v72 = vld [vmem:[#allocation2 + $0x6c] sm:$0xff]
    %v73 = vld [vmem:[#allocation2 + $0x74] sm:$0xf]
    %v74 = vld [vmem:[#allocation2 + $0x78] sm:$0xff]
    %v75 = vld [vmem:[#allocation2 + $0x80] sm:$0xf]
    %v76 = vld [vmem:[#allocation2 + $0x84] sm:$0xff]
    %v77 = vld [vmem:[#allocation2 + $0x8c] sm:$0xf]
    %v78 = vld [vmem:[#allocation2 + $0x90] sm:$0xff]
    %v79 = vld [vmem:[#allocation2 + $0x98] sm:$0xf]
    %v80 = vld [vmem:[#allocation2 + $0x9c] sm:$0xff]
    %v81 = vld [vmem:[#allocation2 + $0xa4] sm:$0xf]
    %v82 = vld [vmem:[#allocation2 + $0xa8] sm:$0xff]
    %v83 = vld [vmem:[#allocation2 + $0xb0] sm:$0xf]
    %v84 = vld [vmem:[#allocation2 + $0xb4] sm:$0xff]
    %v85 = vld [vmem:[#allocation2 + $0xbc] sm:$0xf]
    %v86 = vld [vmem:[%s2] sm:$0x1]
    %s87 = smul.u32 0, 8
    %v88 = vld [vmem:[#allocation7] sm:$0xff]
    %v89 = vld [vmem:[#allocation7 + $0x8] sm:$0xff]
    %v90 = vld [vmem:[#allocation4] sm:$0xff]
    %v91 = vld [vmem:[#allocation4 + $0x8] sm:$0xf]
    %v92 = vld [vmem:[#allocation4 + $0xc] sm:$0xff]
    %v93 = vld [vmem:[#allocation4 + $0x14] sm:$0xf]
    %v94 = vpack.c.bf16 %v89, %v88
    %v127 = vunpack.c.l.b16 %v54
    %v128 = vunpack.c.h.b16 %v54
    %v129 = vunpack.c.l.b16 %v55
    %v130 = vunpack.c.l.b16 %v56
    %v131 = vunpack.c.h.b16 %v56
    %v132 = vunpack.c.l.b16 %v57
    %v133 = vunpack.c.l.b16 %v58
    %v134 = vunpack.c.h.b16 %v58
    %v135 = vunpack.c.l.b16 %v59
    %v136 = vunpack.c.l.b16 %v60
    %v137 = vunpack.c.h.b16 %v60
    %v138 = vunpack.c.l.b16 %v61
    %v139 = vunpack.c.l.b16 %v62
    %v140 = vunpack.c.h.b16 %v62
    %v141 = vunpack.c.l.b16 %v63
    %v142 = vunpack.c.l.b16 %v64
    %v143 = vunpack.c.h.b16 %v64
    %v144 = vunpack.c.l.b16 %v65
    %v145 = vunpack.c.l.b16 %v66
    %v146 = vunpack.c.h.b16 %v66
    %v147 = vunpack.c.l.b16 %v67
    %v148 = vunpack.c.l.b16 %v68
    %v149 = vunpack.c.h.b16 %v68
    %v150 = vunpack.c.l.b16 %v69
    %v151 = vunpack.c.l.b16 %v70
    %v152 = vunpack.c.h.b16 %v70
    %v153 = vunpack.c.l.b16 %v71
    %v154 = vunpack.c.l.b16 %v72
    %v155 = vunpack.c.h.b16 %v72
    %v156 = vunpack.c.l.b16 %v73
    %v157 = vunpack.c.l.b16 %v74
    %v158 = vunpack.c.h.b16 %v74
    %v159 = vunpack.c.l.b16 %v75
    %v160 = vunpack.c.l.b16 %v76
    %v161 = vunpack.c.h.b16 %v76
    %v162 = vunpack.c.l.b16 %v77
    %v163 = vunpack.c.l.b16 %v78
    %v164 = vunpack.c.h.b16 %v78
    %v165 = vunpack.c.l.b16 %v79
    %v166 = vunpack.c.l.b16 %v80
    %v167 = vunpack.c.h.b16 %v80
    %v168 = vunpack.c.l.b16 %v81
    %v169 = vunpack.c.l.b16 %v82
    %v170 = vunpack.c.h.b16 %v82
    %v171 = vunpack.c.l.b16 %v83
    %v172 = vunpack.c.l.b16 %v84
    %v173 = vunpack.c.h.b16 %v84
    %v174 = vunpack.c.l.b16 %v85
    %v175 = vpack.c.b16 %v130, %v127
    %v176 = vpack.c.b16 %v131, %v128
    %v177 = vpack.c.b16 %v132, %v129
    %v178 = vpack.c.b16 %v136, %v133
    %v179 = vpack.c.b16 %v137, %v134
    %v180 = vpack.c.b16 %v138, %v135
    %v181 = vpack.c.b16 %v142, %v139
    %v182 = vpack.c.b16 %v143, %v140
    %v183 = vpack.c.b16 %v144, %v141
    %v184 = vpack.c.b16 %v148, %v145
    %v185 = vpack.c.b16 %v149, %v146
    %v186 = vpack.c.b16 %v150, %v147
    %v187 = vpack.c.b16 %v154, %v151
    %v188 = vpack.c.b16 %v155, %v152
    %v189 = vpack.c.b16 %v156, %v153
    %v190 = vpack.c.b16 %v160, %v157
    %v191 = vpack.c.b16 %v161, %v158
    %v192 = vpack.c.b16 %v162, %v159
    %v193 = vpack.c.b16 %v166, %v163
    %v194 = vpack.c.b16 %v167, %v164
    %v195 = vpack.c.b16 %v168, %v165
    %v196 = vpack.c.b16 %v172, %v169
    %v197 = vpack.c.b16 %v173, %v170
    %v198 = vpack.c.b16 %v174, %v171
    %223 = vmatprep.subr.bf16.mxu0 %v197
    %224 = vmatpush1.bf16.msra.mxu0 %v196
    %225 = vmatprep.subr.bf16.mxu0 %v194
    %226 = vmatpush1.bf16.msra.mxu0 %v193
    %227 = vmatprep.subr.bf16.mxu0 %v191
    %228 = vmatpush1.bf16.msra.mxu0 %v190
    %229 = vmatprep.subr.bf16.mxu0 %v188
    %230 = vmatpush1.bf16.msra.mxu0 %v187
    %231 = vmatprep.subr.bf16.mxu0 %v185
    %232 = vmatpush1.bf16.msra.mxu0 %v184
    %233 = vmatprep.subr.bf16.mxu0 %v182
    %234 = vmatpush1.bf16.msra.mxu0 %v181
    %235 = vmatprep.subr.bf16.mxu0 %v179
    %236 = vmatpush1.bf16.msra.mxu0 %v178
    %237 = vmatprep.subr.bf16.mxu0 %v176
    %238 = vmatpush1.bf16.msra.mxu0 %v175
    %239 = vmatprep.subr.bf16.mxu0 0
    %240 = vmatpush2.bf16.msra.mxu0 0
    %241 = vmatprep.subr.bf16.mxu0 0
    %242 = vmatpush2.bf16.msra.mxu0 0
    %243 = vmatprep.subr.bf16.mxu0 0
    %244 = vmatpush2.bf16.msra.mxu0 0
    %245 = vmatprep.subr.bf16.mxu0 0
    %246 = vmatpush2.bf16.msra.mxu0 0
    %247 = vmatprep.subr.bf16.mxu0 0
    %248 = vmatpush2.bf16.msra.mxu0 0
    %249 = vmatprep.subr.bf16.mxu0 0
    %250 = vmatpush2.bf16.msra.mxu0 0
    %251 = vmatprep.subr.bf16.mxu0 0
    %252 = vmatpush2.bf16.msra.mxu0 0
    %253 = vmatprep.subr.bf16.mxu0 0
    %254 = vmatpush2.bf16.msra.mxu0 0
    %255 = vmatprep.mubr.bf16.mxu0 0
    %256 = vmatmul.mubr.bf16.gmra.mxu0 %v94
    %v257 = vpop.f32.mrf.mxu0
    %v258 = vadd.f32 0.0, %v257
    %v259 = vpop.f32.mrf.mxu0
    %v260 = vadd.f32 0.0, %v259
    %v261 = vpop.f32.mrf.mxu0
    %v262 = vadd.f32 0.0, %v261
    %v263 = vpop.f32.mrf.mxu0
    %v264 = vadd.f32 0.0, %v263
    %265 = vdwg.mxu0
    %266 = vmatprep.subr.bf16.mxu0 0
    %267 = vmatpush1.bf16.msra.mxu0 %v198
    %268 = vmatprep.subr.bf16.mxu0 0
    %269 = vmatpush1.bf16.msra.mxu0 %v195
    %270 = vmatprep.subr.bf16.mxu0 0
    %271 = vmatpush1.bf16.msra.mxu0 %v192
    %272 = vmatprep.subr.bf16.mxu0 0
    %273 = vmatpush1.bf16.msra.mxu0 %v189
    %274 = vmatprep.subr.bf16.mxu0 0
    %275 = vmatpush1.bf16.msra.mxu0 %v186
    %276 = vmatprep.subr.bf16.mxu0 0
    %277 = vmatpush1.bf16.msra.mxu0 %v183
    %278 = vmatprep.subr.bf16.mxu0 0
    %279 = vmatpush1.bf16.msra.mxu0 %v180
    %280 = vmatprep.subr.bf16.mxu0 0
    %281 = vmatpush1.bf16.msra.mxu0 %v177
    %282 = vmatprep.subr.bf16.mxu0 0
    %283 = vmatpush2.bf16.msra.mxu0 0
    %284 = vmatprep.subr.bf16.mxu0 0
    %285 = vmatpush2.bf16.msra.mxu0 0
    %286 = vmatprep.subr.bf16.mxu0 0
    %287 = vmatpush2.bf16.msra.mxu0 0
    %288 = vmatprep.subr.bf16.mxu0 0
    %289 = vmatpush2.bf16.msra.mxu0 0
    %290 = vmatprep.subr.bf16.mxu0 0
    %291 = vmatpush2.bf16.msra.mxu0 0
    %292 = vmatprep.subr.bf16.mxu0 0
    %293 = vmatpush2.bf16.msra.mxu0 0
    %294 = vmatprep.subr.bf16.mxu0 0
    %295 = vmatpush2.bf16.msra.mxu0 0
    %296 = vmatprep.subr.bf16.mxu0 0
    %297 = vmatpush2.bf16.msra.mxu0 0
    %298 = vmatprep.mubr.bf16.mxu0 0
    %299 = vmatmul.mubr.bf16.gmra.mxu0 %v94
    %v300 = vpop.f32.mrf.mxu0
    %v301 = vadd.f32 0.0, %v300
    %v302 = vpop.f32.mrf.mxu0
    %v303 = vpop.f32.mrf.mxu0
    %v304 = vadd.f32 0.0, %v303
    %v305 = vpop.f32.mrf.mxu0
    %306 = vdwg.mxu0
    %v307 = vunpack.c.l.bf16 %v90
    %v308 = vunpack.c.l.bf16 %v92
    %v309 = vadd.f32 %v307, %v258
    %v310 = vadd.f32 %v308, %v262
    %v311 = vxor.u32 %v309, 2147483648
    %v312 = vxor.u32 %v310, 2147483648
    %v313 = vmul.f32 %v311, 1.442695
    %v314 = vpow.pop %v313
    %v315 = vmul.f32 %v312, 1.442695
    %v316 = vpow.pop %v315
    %v317 = vadd.f32 %v314, 1.0
    %v318 = vadd.f32 %v316, 1.0
    %v319 = vrcp.pop %v317
    %v320 = vmul.f32 1.0, %v319
    %v321 = vrcp.pop %v318
    %v322 = vmul.f32 1.0, %v321
    %v325 = vrot.slane %v90, 4
    %v326 = vrot.slane %v92, 4
    %v329 = vunpack.c.l.bf16 %v325
    %v330 = vunpack.c.l.bf16 %v326
    %v331 = vadd.f32 %v329, %v260
    %v332 = vadd.f32 %v330, %v264
    %v333 = vxor.u32 %v331, 2147483648
    %v334 = vxor.u32 %v332, 2147483648
    %v335 = vmul.f32 %v333, 1.442695
    %v336 = vpow.pop %v335
    %v337 = vmul.f32 %v334, 1.442695
    %v338 = vpow.pop %v337
    %v339 = vadd.f32 %v336, 1.0
    %v340 = vadd.f32 %v338, 1.0
    %v341 = vrcp.pop %v339
    %v342 = vmul.f32 1.0, %v341
    %v343 = vrcp.pop %v340
    %v344 = vmul.f32 1.0, %v343
    %v346 = vlaneseq
    %v347 = vshrl.u32 %v346, 7
    %v348 = vsub.s32 0, %v347
    %v349 = vrot.slane %v86, %v348
    %v351 = vadd.f32 %v301, %v349
    %v352 = vadd.f32 %v304, %v349
    %v353 = vmul.f32 %v320, %v351
    %v354 = vmul.f32 %v322, %v352
    %v355 = vunpack.c.l.bf16 %v91
    %v356 = vunpack.c.l.bf16 %v93
    %v357 = vadd.f32 %v355, %v353
    %v358 = vadd.f32 %v356, %v354
    %v359 = vtanh.pop %v357
    %v360 = vtanh.pop %v358
    %v361 = vsub.f32 1.0, %v342
    %v362 = vsub.f32 1.0, %v344
    %v363 = vmul.f32 %v361, %v359
    %v364 = vmul.f32 %v362, %v360
    %v365 = vmul.f32 %v342, %v88
    %v366 = vmul.f32 %v344, %v89
    %v367 = vadd.f32 %v363, %v365
    %v368 = vadd.f32 %v364, %v366
    %s369 = sadd.s32 %s87, 1
    %v370 = vstv %s369
    %vm371 = vcmp.le.s32.totalorder %v370, %v52
    %vm372 = vcmp.le.s32.totalorder %v370, %v53
    %v373 = vsel %vm371, 1, 0
    %v374 = vsel %vm372, 1, 0
    %375 = vset.pattern.permute.xlu0 0
    %376 = vperm.xlu0 %375, %v373
    %v377 = vpop.permute.xlu0 %376
    %378 = vset.pattern.permute.xlu0 0
    %379 = vperm.xlu0 %378, %v374
    %v380 = vpop.permute.xlu0 %379
    %vm381 = vcmp.eq.s32.totalorder %v377, 1
    %vm382 = vcmp.eq.s32.totalorder %v380, 1
    %v383 = vsel %vm381, %v367, %v88
    %v384 = vsel %vm382, %v368, %v89
    %s385 = scalar_lea.vmem [#allocation4], 24
    %v386 = vld [vmem:[%s385] sm:$0xff]
    %v387 = vld [vmem:[%s385 + $0x8] sm:$0xf]
    %v388 = vld [vmem:[%s385 + $0xc] sm:$0xff]
    %v389 = vld [vmem:[%s385 + $0x14] sm:$0xf]
    %v390 = vpack.c.bf16 %v384, %v383
    %391 = vmatprep.subr.bf16.mxu0 %v197
    %392 = vmatpush1.bf16.msra.mxu0 %v196
    %393 = vmatprep.subr.bf16.mxu0 %v194
    %394 = vmatpush1.bf16.msra.mxu0 %v193
    %395 = vmatprep.subr.bf16.mxu0 %v191
    %396 = vmatpush1.bf16.msra.mxu0 %v190
    %397 = vmatprep.subr.bf16.mxu0 %v188
    %398 = vmatpush1.bf16.msra.mxu0 %v187
    %399 = vmatprep.subr.bf16.mxu0 %v185
    %400 = vmatpush1.bf16.msra.mxu0 %v184
    %401 = vmatprep.subr.bf16.mxu0 %v182
    %402 = vmatpush1.bf16.msra.mxu0 %v181
    %403 = vmatprep.subr.bf16.mxu0 %v179
    %404 = vmatpush1.bf16.msra.mxu0 %v178
    %405 = vmatprep.subr.bf16.mxu0 %v176
    %406 = vmatpush1.bf16.msra.mxu0 %v175
    %407 = vmatprep.subr.bf16.mxu0 0
    %408 = vmatpush2.bf16.msra.mxu0 0
    %409 = vmatprep.subr.bf16.mxu0 0
    %410 = vmatpush2.bf16.msra.mxu0 0
    %411 = vmatprep.subr.bf16.mxu0 0
    %412 = vmatpush2.bf16.msra.mxu0 0
    %413 = vmatprep.subr.bf16.mxu0 0
    %414 = vmatpush2.bf16.msra.mxu0 0
    %415 = vmatprep.subr.bf16.mxu0 0
    %416 = vmatpush2.bf16.msra.mxu0 0
    %417 = vmatprep.subr.bf16.mxu0 0
    %418 = vmatpush2.bf16.msra.mxu0 0
    %419 = vmatprep.subr.bf16.mxu0 0
    %420 = vmatpush2.bf16.msra.mxu0 0
    %421 = vmatprep.subr.bf16.mxu0 0
    %422 = vmatpush2.bf16.msra.mxu0 0
    %423 = vmatprep.mubr.bf16.mxu0 0
    %424 = vmatmul.mubr.bf16.gmra.mxu0 %v390
    %v425 = vpop.f32.mrf.mxu0
    %v426 = vadd.f32 0.0, %v425
    %v427 = vpop.f32.mrf.mxu0
    %v428 = vadd.f32 0.0, %v427
    %v429 = vpop.f32.mrf.mxu0
    %v430 = vadd.f32 0.0, %v429
    %v431 = vpop.f32.mrf.mxu0
    %v432 = vadd.f32 0.0, %v431
    %433 = vdwg.mxu0
    %434 = vmatprep.subr.bf16.mxu0 0
    %435 = vmatpush1.bf16.msra.mxu0 %v198
    %436 = vmatprep.subr.bf16.mxu0 0
    %437 = vmatpush1.bf16.msra.mxu0 %v195
    %438 = vmatprep.subr.bf16.mxu0 0
    %439 = vmatpush1.bf16.msra.mxu0 %v192
    %440 = vmatprep.subr.bf16.mxu0 0
    %441 = vmatpush1.bf16.msra.mxu0 %v189
    %442 = vmatprep.subr.bf16.mxu0 0
    %443 = vmatpush1.bf16.msra.mxu0 %v186
    %444 = vmatprep.subr.bf16.mxu0 0
    %445 = vmatpush1.bf16.msra.mxu0 %v183
    %446 = vmatprep.subr.bf16.mxu0 0
    %447 = vmatpush1.bf16.msra.mxu0 %v180
    %448 = vmatprep.subr.bf16.mxu0 0
    %449 = vmatpush1.bf16.msra.mxu0 %v177
    %450 = vmatprep.subr.bf16.mxu0 0
    %451 = vmatpush2.bf16.msra.mxu0 0
    %452 = vmatprep.subr.bf16.mxu0 0
    %453 = vmatpush2.bf16.msra.mxu0 0
    %454 = vmatprep.subr.bf16.mxu0 0
    %455 = vmatpush2.bf16.msra.mxu0 0
    %456 = vmatprep.subr.bf16.mxu0 0
    %457 = vmatpush2.bf16.msra.mxu0 0
    %458 = vmatprep.subr.bf16.mxu0 0
    %459 = vmatpush2.bf16.msra.mxu0 0
    %460 = vmatprep.subr.bf16.mxu0 0
    %461 = vmatpush2.bf16.msra.mxu0 0
    %462 = vmatprep.subr.bf16.mxu0 0
    %463 = vmatpush2.bf16.msra.mxu0 0
    %464 = vmatprep.subr.bf16.mxu0 0
    %465 = vmatpush2.bf16.msra.mxu0 0
    %466 = vmatprep.mubr.bf16.mxu0 0
    %467 = vmatmul.mubr.bf16.gmra.mxu0 %v390
    %v468 = vpop.f32.mrf.mxu0
    %v469 = vadd.f32 0.0, %v468
    %v470 = vpop.f32.mrf.mxu0
    %v471 = vpop.f32.mrf.mxu0
    %v472 = vadd.f32 0.0, %v471
    %v473 = vpop.f32.mrf.mxu0
    %474 = vdwg.mxu0
    %v475 = vunpack.c.l.bf16 %v386
    %v476 = vunpack.c.l.bf16 %v388
    %v477 = vadd.f32 %v475, %v426
    %v478 = vadd.f32 %v476, %v430
    %v479 = vxor.u32 %v477, 2147483648
    %v480 = vxor.u32 %v478, 2147483648
    %v481 = vmul.f32 %v479, 1.442695
    %v482 = vpow.pop %v481
    %v483 = vmul.f32 %v480, 1.442695
    %v484 = vpow.pop %v483
    %v485 = vadd.f32 %v482, 1.0
    %v486 = vadd.f32 %v484, 1.0
    %v487 = vrcp.pop %v485
    %v488 = vmul.f32 1.0, %v487
    %v489 = vrcp.pop %v486
    %v490 = vmul.f32 1.0, %v489
    %v493 = vrot.slane %v386, 4
    %v494 = vrot.slane %v388, 4
    %v497 = vunpack.c.l.bf16 %v493
    %v498 = vunpack.c.l.bf16 %v494
    %v499 = vadd.f32 %v497, %v428
    %v500 = vadd.f32 %v498, %v432
    %v501 = vxor.u32 %v499, 2147483648
    %v502 = vxor.u32 %v500, 2147483648
    %v503 = vmul.f32 %v501, 1.442695
    %v504 = vpow.pop %v503
    %v505 = vmul.f32 %v502, 1.442695
    %v506 = vpow.pop %v505
    %v507 = vadd.f32 %v504, 1.0
    %v508 = vadd.f32 %v506, 1.0
    %v509 = vrcp.pop %v507
    %v510 = vmul.f32 1.0, %v509
    %v511 = vrcp.pop %v508
    %v512 = vmul.f32 1.0, %v511
    %v513 = vadd.f32 %v469, %v349
    %v514 = vadd.f32 %v472, %v349
    %v515 = vmul.f32 %v488, %v513
    %v516 = vmul.f32 %v490, %v514
    %v517 = vunpack.c.l.bf16 %v387
    %v518 = vunpack.c.l.bf16 %v389
    %v519 = vadd.f32 %v517, %v515
    %v520 = vadd.f32 %v518, %v516
    %v521 = vtanh.pop %v519
    %v522 = vtanh.pop %v520
    %v523 = vsub.f32 1.0, %v510
    %v524 = vsub.f32 1.0, %v512
    %v525 = vmul.f32 %v523, %v521
    %v526 = vmul.f32 %v524, %v522
    %v527 = vmul.f32 %v510, %v383
    %v528 = vmul.f32 %v512, %v384
    %v529 = vadd.f32 %v525, %v527
    %v530 = vadd.f32 %v526, %v528
    %s531 = sadd.s32 %s87, 2
    %v532 = vstv %s531
    %vm533 = vcmp.le.s32.totalorder %v532, %v52
    %vm534 = vcmp.le.s32.totalorder %v532, %v53
    %v535 = vsel %vm533, 1, 0
    %v536 = vsel %vm534, 1, 0
    %537 = vset.pattern.permute.xlu0 0
    %538 = vperm.xlu0 %537, %v535
    %v539 = vpop.permute.xlu0 %538
    %540 = vset.pattern.permute.xlu0 0
    %541 = vperm.xlu0 %540, %v536
    %v542 = vpop.permute.xlu0 %541
    %vm543 = vcmp.eq.s32.totalorder %v539, 1
    %vm544 = vcmp.eq.s32.totalorder %v542, 1
    %v545 = vsel %vm543, %v529, %v383
    %v546 = vsel %vm544, %v530, %v384
    %s547 = scalar_lea.vmem [#allocation4], 48
    %v548 = vld [vmem:[%s547] sm:$0xff]
    %v549 = vld [vmem:[%s547 + $0x8] sm:$0xf]
    %v550 = vld [vmem:[%s547 + $0xc] sm:$0xff]
    %v551 = vld [vmem:[%s547 + $0x14] sm:$0xf]
    %v552 = vpack.c.bf16 %v546, %v545
    %553 = vmatprep.subr.bf16.mxu0 %v197
    %554 = vmatpush1.bf16.msra.mxu0 %v196
    %555 = vmatprep.subr.bf16.mxu0 %v194
    %556 = vmatpush1.bf16.msra.mxu0 %v193
    %557 = vmatprep.subr.bf16.mxu0 %v191
    %558 = vmatpush1.bf16.msra.mxu0 %v190
    %559 = vmatprep.subr.bf16.mxu0 %v188
    %560 = vmatpush1.bf16.msra.mxu0 %v187
    %561 = vmatprep.subr.bf16.mxu0 %v185
    %562 = vmatpush1.bf16.msra.mxu0 %v184
    %563 = vmatprep.subr.bf16.mxu0 %v182
    %564 = vmatpush1.bf16.msra.mxu0 %v181
    %565 = vmatprep.subr.bf16.mxu0 %v179
    %566 = vmatpush1.bf16.msra.mxu0 %v178
    %567 = vmatprep.subr.bf16.mxu0 %v176
    %568 = vmatpush1.bf16.msra.mxu0 %v175
    %569 = vmatprep.subr.bf16.mxu0 0
    %570 = vmatpush2.bf16.msra.mxu0 0
    %571 = vmatprep.subr.bf16.mxu0 0
    %572 = vmatpush2.bf16.msra.mxu0 0
    %573 = vmatprep.subr.bf16.mxu0 0
    %574 = vmatpush2.bf16.msra.mxu0 0
    %575 = vmatprep.subr.bf16.mxu0 0
    %576 = vmatpush2.bf16.msra.mxu0 0
    %577 = vmatprep.subr.bf16.mxu0 0
    %578 = vmatpush2.bf16.msra.mxu0 0
    %579 = vmatprep.subr.bf16.mxu0 0
    %580 = vmatpush2.bf16.msra.mxu0 0
    %581 = vmatprep.subr.bf16.mxu0 0
    %582 = vmatpush2.bf16.msra.mxu0 0
    %583 = vmatprep.subr.bf16.mxu0 0
    %584 = vmatpush2.bf16.msra.mxu0 0
    %585 = vmatprep.mubr.bf16.mxu0 0
    %586 = vmatmul.mubr.bf16.gmra.mxu0 %v552
    %v587 = vpop.f32.mrf.mxu0
    %v588 = vadd.f32 0.0, %v587
    %v589 = vpop.f32.mrf.mxu0
    %v590 = vadd.f32 0.0, %v589
    %v591 = vpop.f32.mrf.mxu0
    %v592 = vadd.f32 0.0, %v591
    %v593 = vpop.f32.mrf.mxu0
    %v594 = vadd.f32 0.0, %v593
    %595 = vdwg.mxu0
    %596 = vmatprep.subr.bf16.mxu0 0
    %597 = vmatpush1.bf16.msra.mxu0 %v198
    %598 = vmatprep.subr.bf16.mxu0 0
    %599 = vmatpush1.bf16.msra.mxu0 %v195
    %600 = vmatprep.subr.bf16.mxu0 0
    %601 = vmatpush1.bf16.msra.mxu0 %v192
    %602 = vmatprep.subr.bf16.mxu0 0
    %603 = vmatpush1.bf16.msra.mxu0 %v189
    %604 = vmatprep.subr.bf16.mxu0 0
    %605 = vmatpush1.bf16.msra.mxu0 %v186
    %606 = vmatprep.subr.bf16.mxu0 0
    %607 = vmatpush1.bf16.msra.mxu0 %v183
    %608 = vmatprep.subr.bf16.mxu0 0
    %609 = vmatpush1.bf16.msra.mxu0 %v180
    %610 = vmatprep.subr.bf16.mxu0 0
    %611 = vmatpush1.bf16.msra.mxu0 %v177
    %612 = vmatprep.subr.bf16.mxu0 0
    %613 = vmatpush2.bf16.msra.mxu0 0
    %614 = vmatprep.subr.bf16.mxu0 0
    %615 = vmatpush2.bf16.msra.mxu0 0
    %616 = vmatprep.subr.bf16.mxu0 0
    %617 = vmatpush2.bf16.msra.mxu0 0
    %618 = vmatprep.subr.bf16.mxu0 0
    %619 = vmatpush2.bf16.msra.mxu0 0
    %620 = vmatprep.subr.bf16.mxu0 0
    %621 = vmatpush2.bf16.msra.mxu0 0
    %622 = vmatprep.subr.bf16.mxu0 0
    %623 = vmatpush2.bf16.msra.mxu0 0
    %624 = vmatprep.subr.bf16.mxu0 0
    %625 = vmatpush2.bf16.msra.mxu0 0
    %626 = vmatprep.subr.bf16.mxu0 0
    %627 = vmatpush2.bf16.msra.mxu0 0
    %628 = vmatprep.mubr.bf16.mxu0 0
    %629 = vmatmul.mubr.bf16.gmra.mxu0 %v552
    %v630 = vpop.f32.mrf.mxu0
    %v631 = vadd.f32 0.0, %v630
    %v632 = vpop.f32.mrf.mxu0
    %v633 = vpop.f32.mrf.mxu0
    %v634 = vadd.f32 0.0, %v633
    %v635 = vpop.f32.mrf.mxu0
    %636 = vdwg.mxu0
    %v637 = vunpack.c.l.bf16 %v548
    %v638 = vunpack.c.l.bf16 %v550
    %v639 = vadd.f32 %v637, %v588
    %v640 = vadd.f32 %v638, %v592
    %v641 = vxor.u32 %v639, 2147483648
    %v642 = vxor.u32 %v640, 2147483648
    %v643 = vmul.f32 %v641, 1.442695
    %v644 = vpow.pop %v643
    %v645 = vmul.f32 %v642, 1.442695
    %v646 = vpow.pop %v645
    %v647 = vadd.f32 %v644, 1.0
    %v648 = vadd.f32 %v646, 1.0
    %v649 = vrcp.pop %v647
    %v650 = vmul.f32 1.0, %v649
    %v651 = vrcp.pop %v648
    %v652 = vmul.f32 1.0, %v651
    %v655 = vrot.slane %v548, 4
    %v656 = vrot.slane %v550, 4
    %v659 = vunpack.c.l.bf16 %v655
    %v660 = vunpack.c.l.bf16 %v656
    %v661 = vadd.f32 %v659, %v590
    %v662 = vadd.f32 %v660, %v594
    %v663 = vxor.u32 %v661, 2147483648
    %v664 = vxor.u32 %v662, 2147483648
    %v665 = vmul.f32 %v663, 1.442695
    %v666 = vpow.pop %v665
    %v667 = vmul.f32 %v664, 1.442695
    %v668 = vpow.pop %v667
    %v669 = vadd.f32 %v666, 1.0
    %v670 = vadd.f32 %v668, 1.0
    %v671 = vrcp.pop %v669
    %v672 = vmul.f32 1.0, %v671
    %v673 = vrcp.pop %v670
    %v674 = vmul.f32 1.0, %v673
    %v675 = vadd.f32 %v631, %v349
    %v676 = vadd.f32 %v634, %v349
    %v677 = vmul.f32 %v650, %v675
    %v678 = vmul.f32 %v652, %v676
    %v679 = vunpack.c.l.bf16 %v549
    %v680 = vunpack.c.l.bf16 %v551
    %v681 = vadd.f32 %v679, %v677
    %v682 = vadd.f32 %v680, %v678
    %v683 = vtanh.pop %v681
    %v684 = vtanh.pop %v682
    %v685 = vsub.f32 1.0, %v672
    %v686 = vsub.f32 1.0, %v674
    %v687 = vmul.f32 %v685, %v683
    %v688 = vmul.f32 %v686, %v684
    %v689 = vmul.f32 %v672, %v545
    %v690 = vmul.f32 %v674, %v546
    %v691 = vadd.f32 %v687, %v689
    %v692 = vadd.f32 %v688, %v690
    %s693 = sadd.s32 %s87, 3
    %v694 = vstv %s693
    %vm695 = vcmp.le.s32.totalorder %v694, %v52
    %vm696 = vcmp.le.s32.totalorder %v694, %v53
    %v697 = vsel %vm695, 1, 0
    %v698 = vsel %vm696, 1, 0
    %699 = vset.pattern.permute.xlu0 0
    %700 = vperm.xlu0 %699, %v697
    %v701 = vpop.permute.xlu0 %700
    %702 = vset.pattern.permute.xlu0 0
    %703 = vperm.xlu0 %702, %v698
    %v704 = vpop.permute.xlu0 %703
    %vm705 = vcmp.eq.s32.totalorder %v701, 1
    %vm706 = vcmp.eq.s32.totalorder %v704, 1
    %v707 = vsel %vm705, %v691, %v545
    %v708 = vsel %vm706, %v692, %v546
    %s709 = scalar_lea.vmem [#allocation4], 72
    %v710 = vld [vmem:[%s709] sm:$0xff]
    %v711 = vld [vmem:[%s709 + $0x8] sm:$0xf]
    %v712 = vld [vmem:[%s709 + $0xc] sm:$0xff]
    %v713 = vld [vmem:[%s709 + $0x14] sm:$0xf]
    %v714 = vpack.c.bf16 %v708, %v707
    %715 = vmatprep.subr.bf16.mxu0 %v197
    %716 = vmatpush1.bf16.msra.mxu0 %v196
    %717 = vmatprep.subr.bf16.mxu0 %v194
    %718 = vmatpush1.bf16.msra.mxu0 %v193
    %719 = vmatprep.subr.bf16.mxu0 %v191
    %720 = vmatpush1.bf16.msra.mxu0 %v190
    %721 = vmatprep.subr.bf16.mxu0 %v188
    %722 = vmatpush1.bf16.msra.mxu0 %v187
    %723 = vmatprep.subr.bf16.mxu0 %v185
    %724 = vmatpush1.bf16.msra.mxu0 %v184
    %725 = vmatprep.subr.bf16.mxu0 %v182
    %726 = vmatpush1.bf16.msra.mxu0 %v181
    %727 = vmatprep.subr.bf16.mxu0 %v179
    %728 = vmatpush1.bf16.msra.mxu0 %v178
    %729 = vmatprep.subr.bf16.mxu0 %v176
    %730 = vmatpush1.bf16.msra.mxu0 %v175
    %731 = vmatprep.subr.bf16.mxu0 0
    %732 = vmatpush2.bf16.msra.mxu0 0
    %733 = vmatprep.subr.bf16.mxu0 0
    %734 = vmatpush2.bf16.msra.mxu0 0
    %735 = vmatprep.subr.bf16.mxu0 0
    %736 = vmatpush2.bf16.msra.mxu0 0
    %737 = vmatprep.subr.bf16.mxu0 0
    %738 = vmatpush2.bf16.msra.mxu0 0
    %739 = vmatprep.subr.bf16.mxu0 0
    %740 = vmatpush2.bf16.msra.mxu0 0
    %741 = vmatprep.subr.bf16.mxu0 0
    %742 = vmatpush2.bf16.msra.mxu0 0
    %743 = vmatprep.subr.bf16.mxu0 0
    %744 = vmatpush2.bf16.msra.mxu0 0
    %745 = vmatprep.subr.bf16.mxu0 0
    %746 = vmatpush2.bf16.msra.mxu0 0
    %747 = vmatprep.mubr.bf16.mxu0 0
    %748 = vmatmul.mubr.bf16.gmra.mxu0 %v714
    %v749 = vpop.f32.mrf.mxu0
    %v750 = vadd.f32 0.0, %v749
    %v751 = vpop.f32.mrf.mxu0
    %v752 = vadd.f32 0.0, %v751
    %v753 = vpop.f32.mrf.mxu0
    %v754 = vadd.f32 0.0, %v753
    %v755 = vpop.f32.mrf.mxu0
    %v756 = vadd.f32 0.0, %v755
    %757 = vdwg.mxu0
    %758 = vmatprep.subr.bf16.mxu0 0
    %759 = vmatpush1.bf16.msra.mxu0 %v198
    %760 = vmatprep.subr.bf16.mxu0 0
    %761 = vmatpush1.bf16.msra.mxu0 %v195
    %762 = vmatprep.subr.bf16.mxu0 0
    %763 = vmatpush1.bf16.msra.mxu0 %v192
    %764 = vmatprep.subr.bf16.mxu0 0
    %765 = vmatpush1.bf16.msra.mxu0 %v189
    %766 = vmatprep.subr.bf16.mxu0 0
    %767 = vmatpush1.bf16.msra.mxu0 %v186
    %768 = vmatprep.subr.bf16.mxu0 0
    %769 = vmatpush1.bf16.msra.mxu0 %v183
    %770 = vmatprep.subr.bf16.mxu0 0
    %771 = vmatpush1.bf16.msra.mxu0 %v180
    %772 = vmatprep.subr.bf16.mxu0 0
    %773 = vmatpush1.bf16.msra.mxu0 %v177
    %774 = vmatprep.subr.bf16.mxu0 0
    %775 = vmatpush2.bf16.msra.mxu0 0
    %776 = vmatprep.subr.bf16.mxu0 0
    %777 = vmatpush2.bf16.msra.mxu0 0
    %778 = vmatprep.subr.bf16.mxu0 0
    %779 = vmatpush2.bf16.msra.mxu0 0
    %780 = vmatprep.subr.bf16.mxu0 0
    %781 = vmatpush2.bf16.msra.mxu0 0
    %782 = vmatprep.subr.bf16.mxu0 0
    %783 = vmatpush2.bf16.msra.mxu0 0
    %784 = vmatprep.subr.bf16.mxu0 0
    %785 = vmatpush2.bf16.msra.mxu0 0
    %786 = vmatprep.subr.bf16.mxu0 0
    %787 = vmatpush2.bf16.msra.mxu0 0
    %788 = vmatprep.subr.bf16.mxu0 0
    %789 = vmatpush2.bf16.msra.mxu0 0
    %790 = vmatprep.mubr.bf16.mxu0 0
    %791 = vmatmul.mubr.bf16.gmra.mxu0 %v714
    %v792 = vpop.f32.mrf.mxu0
    %v793 = vadd.f32 0.0, %v792
    %v794 = vpop.f32.mrf.mxu0
    %v795 = vpop.f32.mrf.mxu0
    %v796 = vadd.f32 0.0, %v795
    %v797 = vpop.f32.mrf.mxu0
    %798 = vdwg.mxu0
    %v799 = vunpack.c.l.bf16 %v710
    %v800 = vunpack.c.l.bf16 %v712
    %v801 = vadd.f32 %v799, %v750
    %v802 = vadd.f32 %v800, %v754
    %v803 = vxor.u32 %v801, 2147483648
    %v804 = vxor.u32 %v802, 2147483648
    %v805 = vmul.f32 %v803, 1.442695
    %v806 = vpow.pop %v805
    %v807 = vmul.f32 %v804, 1.442695
    %v808 = vpow.pop %v807
    %v809 = vadd.f32 %v806, 1.0
    %v810 = vadd.f32 %v808, 1.0
    %v811 = vrcp.pop %v809
    %v812 = vmul.f32 1.0, %v811
    %v813 = vrcp.pop %v810
    %v814 = vmul.f32 1.0, %v813
    %v817 = vrot.slane %v710, 4
    %v818 = vrot.slane %v712, 4
    %v821 = vunpack.c.l.bf16 %v817
    %v822 = vunpack.c.l.bf16 %v818
    %v823 = vadd.f32 %v821, %v752
    %v824 = vadd.f32 %v822, %v756
    %v825 = vxor.u32 %v823, 2147483648
    %v826 = vxor.u32 %v824, 2147483648
    %v827 = vmul.f32 %v825, 1.442695
    %v828 = vpow.pop %v827
    %v829 = vmul.f32 %v826, 1.442695
    %v830 = vpow.pop %v829
    %v831 = vadd.f32 %v828, 1.0
    %v832 = vadd.f32 %v830, 1.0
    %v833 = vrcp.pop %v831
    %v834 = vmul.f32 1.0, %v833
    %v835 = vrcp.pop %v832
    %v836 = vmul.f32 1.0, %v835
    %v837 = vadd.f32 %v793, %v349
    %v838 = vadd.f32 %v796, %v349
    %v839 = vmul.f32 %v812, %v837
    %v840 = vmul.f32 %v814, %v838
    %v841 = vunpack.c.l.bf16 %v711
    %v842 = vunpack.c.l.bf16 %v713
    %v843 = vadd.f32 %v841, %v839
    %v844 = vadd.f32 %v842, %v840
    %v845 = vtanh.pop %v843
    %v846 = vtanh.pop %v844
    %v847 = vsub.f32 1.0, %v834
    %v848 = vsub.f32 1.0, %v836
    %v849 = vmul.f32 %v847, %v845
    %v850 = vmul.f32 %v848, %v846
    %v851 = vmul.f32 %v834, %v707
    %v852 = vmul.f32 %v836, %v708
    %v853 = vadd.f32 %v849, %v851
    %v854 = vadd.f32 %v850, %v852
    %s855 = sadd.s32 %s87, 4
    %v856 = vstv %s855
    %vm857 = vcmp.le.s32.totalorder %v856, %v52
    %vm858 = vcmp.le.s32.totalorder %v856, %v53
    %v859 = vsel %vm857, 1, 0
    %v860 = vsel %vm858, 1, 0
    %861 = vset.pattern.permute.xlu0 0
    %862 = vperm.xlu0 %861, %v859
    %v863 = vpop.permute.xlu0 %862
    %864 = vset.pattern.permute.xlu0 0
    %865 = vperm.xlu0 %864, %v860
    %v866 = vpop.permute.xlu0 %865
    %vm867 = vcmp.eq.s32.totalorder %v863, 1
    %vm868 = vcmp.eq.s32.totalorder %v866, 1
    %v869 = vsel %vm867, %v853, %v707
    %v870 = vsel %vm868, %v854, %v708
    %s871 = scalar_lea.vmem [#allocation4], 96
    %v872 = vld [vmem:[%s871] sm:$0xff]
    %v873 = vld [vmem:[%s871 + $0x8] sm:$0xf]
    %v874 = vld [vmem:[%s871 + $0xc] sm:$0xff]
    %v875 = vld [vmem:[%s871 + $0x14] sm:$0xf]
    %v876 = vpack.c.bf16 %v870, %v869
    %877 = vmatprep.subr.bf16.mxu0 %v197
    %878 = vmatpush1.bf16.msra.mxu0 %v196
    %879 = vmatprep.subr.bf16.mxu0 %v194
    %880 = vmatpush1.bf16.msra.mxu0 %v193
    %881 = vmatprep.subr.bf16.mxu0 %v191
    %882 = vmatpush1.bf16.msra.mxu0 %v190
    %883 = vmatprep.subr.bf16.mxu0 %v188
    %884 = vmatpush1.bf16.msra.mxu0 %v187
    %885 = vmatprep.subr.bf16.mxu0 %v185
    %886 = vmatpush1.bf16.msra.mxu0 %v184
    %887 = vmatprep.subr.bf16.mxu0 %v182
    %888 = vmatpush1.bf16.msra.mxu0 %v181
    %889 = vmatprep.subr.bf16.mxu0 %v179
    %890 = vmatpush1.bf16.msra.mxu0 %v178
    %891 = vmatprep.subr.bf16.mxu0 %v176
    %892 = vmatpush1.bf16.msra.mxu0 %v175
    %893 = vmatprep.subr.bf16.mxu0 0
    %894 = vmatpush2.bf16.msra.mxu0 0
    %895 = vmatprep.subr.bf16.mxu0 0
    %896 = vmatpush2.bf16.msra.mxu0 0
    %897 = vmatprep.subr.bf16.mxu0 0
    %898 = vmatpush2.bf16.msra.mxu0 0
    %899 = vmatprep.subr.bf16.mxu0 0
    %900 = vmatpush2.bf16.msra.mxu0 0
    %901 = vmatprep.subr.bf16.mxu0 0
    %902 = vmatpush2.bf16.msra.mxu0 0
    %903 = vmatprep.subr.bf16.mxu0 0
    %904 = vmatpush2.bf16.msra.mxu0 0
    %905 = vmatprep.subr.bf16.mxu0 0
    %906 = vmatpush2.bf16.msra.mxu0 0
    %907 = vmatprep.subr.bf16.mxu0 0
    %908 = vmatpush2.bf16.msra.mxu0 0
    %909 = vmatprep.mubr.bf16.mxu0 0
    %910 = vmatmul.mubr.bf16.gmra.mxu0 %v876
    %v911 = vpop.f32.mrf.mxu0
    %v912 = vadd.f32 0.0, %v911
    %v913 = vpop.f32.mrf.mxu0
    %v914 = vadd.f32 0.0, %v913
    %v915 = vpop.f32.mrf.mxu0
    %v916 = vadd.f32 0.0, %v915
    %v917 = vpop.f32.mrf.mxu0
    %v918 = vadd.f32 0.0, %v917
    %919 = vdwg.mxu0
    %920 = vmatprep.subr.bf16.mxu0 0
    %921 = vmatpush1.bf16.msra.mxu0 %v198
    %922 = vmatprep.subr.bf16.mxu0 0
    %923 = vmatpush1.bf16.msra.mxu0 %v195
    %924 = vmatprep.subr.bf16.mxu0 0
    %925 = vmatpush1.bf16.msra.mxu0 %v192
    %926 = vmatprep.subr.bf16.mxu0 0
    %927 = vmatpush1.bf16.msra.mxu0 %v189
    %928 = vmatprep.subr.bf16.mxu0 0
    %929 = vmatpush1.bf16.msra.mxu0 %v186
    %930 = vmatprep.subr.bf16.mxu0 0
    %931 = vmatpush1.bf16.msra.mxu0 %v183
    %932 = vmatprep.subr.bf16.mxu0 0
    %933 = vmatpush1.bf16.msra.mxu0 %v180
    %934 = vmatprep.subr.bf16.mxu0 0
    %935 = vmatpush1.bf16.msra.mxu0 %v177
    %936 = vmatprep.subr.bf16.mxu0 0
    %937 = vmatpush2.bf16.msra.mxu0 0
    %938 = vmatprep.subr.bf16.mxu0 0
    %939 = vmatpush2.bf16.msra.mxu0 0
    %940 = vmatprep.subr.bf16.mxu0 0
    %941 = vmatpush2.bf16.msra.mxu0 0
    %942 = vmatprep.subr.bf16.mxu0 0
    %943 = vmatpush2.bf16.msra.mxu0 0
    %944 = vmatprep.subr.bf16.mxu0 0
    %945 = vmatpush2.bf16.msra.mxu0 0
    %946 = vmatprep.subr.bf16.mxu0 0
    %947 = vmatpush2.bf16.msra.mxu0 0
    %948 = vmatprep.subr.bf16.mxu0 0
    %949 = vmatpush2.bf16.msra.mxu0 0
    %950 = vmatprep.subr.bf16.mxu0 0
    %951 = vmatpush2.bf16.msra.mxu0 0
    %952 = vmatprep.mubr.bf16.mxu0 0
    %953 = vmatmul.mubr.bf16.gmra.mxu0 %v876
    %v954 = vpop.f32.mrf.mxu0
    %v955 = vadd.f32 0.0, %v954
    %v956 = vpop.f32.mrf.mxu0
    %v957 = vpop.f32.mrf.mxu0
    %v958 = vadd.f32 0.0, %v957
    %v959 = vpop.f32.mrf.mxu0
    %960 = vdwg.mxu0
    %v961 = vunpack.c.l.bf16 %v872
    %v962 = vunpack.c.l.bf16 %v874
    %v963 = vadd.f32 %v961, %v912
    %v964 = vadd.f32 %v962, %v916
    %v965 = vxor.u32 %v963, 2147483648
    %v966 = vxor.u32 %v964, 2147483648
    %v967 = vmul.f32 %v965, 1.442695
    %v968 = vpow.pop %v967
    %v969 = vmul.f32 %v966, 1.442695
    %v970 = vpow.pop %v969
    %v971 = vadd.f32 %v968, 1.0
    %v972 = vadd.f32 %v970, 1.0
    %v973 = vrcp.pop %v971
    %v974 = vmul.f32 1.0, %v973
    %v975 = vrcp.pop %v972
    %v976 = vmul.f32 1.0, %v975
    %v979 = vrot.slane %v872, 4
    %v980 = vrot.slane %v874, 4
    %v983 = vunpack.c.l.bf16 %v979
    %v984 = vunpack.c.l.bf16 %v980
    %v985 = vadd.f32 %v983, %v914
    %v986 = vadd.f32 %v984, %v918
    %v987 = vxor.u32 %v985, 2147483648
    %v988 = vxor.u32 %v986, 2147483648
    %v989 = vmul.f32 %v987, 1.442695
    %v990 = vpow.pop %v989
    %v991 = vmul.f32 %v988, 1.442695
    %v992 = vpow.pop %v991
    %v993 = vadd.f32 %v990, 1.0
    %v994 = vadd.f32 %v992, 1.0
    %v995 = vrcp.pop %v993
    %v996 = vmul.f32 1.0, %v995
    %v997 = vrcp.pop %v994
    %v998 = vmul.f32 1.0, %v997
    %v999 = vadd.f32 %v955, %v349
    %v1000 = vadd.f32 %v958, %v349
    %v1001 = vmul.f32 %v974, %v999
    %v1002 = vmul.f32 %v976, %v1000
    %v1003 = vunpack.c.l.bf16 %v873
    %v1004 = vunpack.c.l.bf16 %v875
    %v1005 = vadd.f32 %v1003, %v1001
    %v1006 = vadd.f32 %v1004, %v1002
    %v1007 = vtanh.pop %v1005
    %v1008 = vtanh.pop %v1006
    %v1009 = vsub.f32 1.0, %v996
    %v1010 = vsub.f32 1.0, %v998
    %v1011 = vmul.f32 %v1009, %v1007
    %v1012 = vmul.f32 %v1010, %v1008
    %v1013 = vmul.f32 %v996, %v869
    %v1014 = vmul.f32 %v998, %v870
    %v1015 = vadd.f32 %v1011, %v1013
    %v1016 = vadd.f32 %v1012, %v1014
    %s1017 = sadd.s32 %s87, 5
    %v1018 = vstv %s1017
    %vm1019 = vcmp.le.s32.totalorder %v1018, %v52
    %vm1020 = vcmp.le.s32.totalorder %v1018, %v53
    %v1021 = vsel %vm1019, 1, 0
    %v1022 = vsel %vm1020, 1, 0
    %1023 = vset.pattern.permute.xlu0 0
    %1024 = vperm.xlu0 %1023, %v1021
    %v1025 = vpop.permute.xlu0 %1024
    %1026 = vset.pattern.permute.xlu0 0
    %1027 = vperm.xlu0 %1026, %v1022
    %v1028 = vpop.permute.xlu0 %1027
    %vm1029 = vcmp.eq.s32.totalorder %v1025, 1
    %vm1030 = vcmp.eq.s32.totalorder %v1028, 1
    %v1031 = vsel %vm1029, %v1015, %v869
    %v1032 = vsel %vm1030, %v1016, %v870
    %s1033 = scalar_lea.vmem [#allocation4], 120
    %v1034 = vld [vmem:[%s1033] sm:$0xff]
    %v1035 = vld [vmem:[%s1033 + $0x8] sm:$0xf]
    %v1036 = vld [vmem:[%s1033 + $0xc] sm:$0xff]
    %v1037 = vld [vmem:[%s1033 + $0x14] sm:$0xf]
    %v1038 = vpack.c.bf16 %v1032, %v1031
    %1039 = vmatprep.subr.bf16.mxu0 %v197
    %1040 = vmatpush1.bf16.msra.mxu0 %v196
    %1041 = vmatprep.subr.bf16.mxu0 %v194
    %1042 = vmatpush1.bf16.msra.mxu0 %v193
    %1043 = vmatprep.subr.bf16.mxu0 %v191
    %1044 = vmatpush1.bf16.msra.mxu0 %v190
    %1045 = vmatprep.subr.bf16.mxu0 %v188
    %1046 = vmatpush1.bf16.msra.mxu0 %v187
    %1047 = vmatprep.subr.bf16.mxu0 %v185
    %1048 = vmatpush1.bf16.msra.mxu0 %v184
    %1049 = vmatprep.subr.bf16.mxu0 %v182
    %1050 = vmatpush1.bf16.msra.mxu0 %v181
    %1051 = vmatprep.subr.bf16.mxu0 %v179
    %1052 = vmatpush1.bf16.msra.mxu0 %v178
    %1053 = vmatprep.subr.bf16.mxu0 %v176
    %1054 = vmatpush1.bf16.msra.mxu0 %v175
    %1055 = vmatprep.subr.bf16.mxu0 0
    %1056 = vmatpush2.bf16.msra.mxu0 0
    %1057 = vmatprep.subr.bf16.mxu0 0
    %1058 = vmatpush2.bf16.msra.mxu0 0
    %1059 = vmatprep.subr.bf16.mxu0 0
    %1060 = vmatpush2.bf16.msra.mxu0 0
    %1061 = vmatprep.subr.bf16.mxu0 0
    %1062 = vmatpush2.bf16.msra.mxu0 0
    %1063 = vmatprep.subr.bf16.mxu0 0
    %1064 = vmatpush2.bf16.msra.mxu0 0
    %1065 = vmatprep.subr.bf16.mxu0 0
    %1066 = vmatpush2.bf16.msra.mxu0 0
    %1067 = vmatprep.subr.bf16.mxu0 0
    %1068 = vmatpush2.bf16.msra.mxu0 0
    %1069 = vmatprep.subr.bf16.mxu0 0
    %1070 = vmatpush2.bf16.msra.mxu0 0
    %1071 = vmatprep.mubr.bf16.mxu0 0
    %1072 = vmatmul.mubr.bf16.gmra.mxu0 %v1038
    %v1073 = vpop.f32.mrf.mxu0
    %v1074 = vadd.f32 0.0, %v1073
    %v1075 = vpop.f32.mrf.mxu0
    %v1076 = vadd.f32 0.0, %v1075
    %v1077 = vpop.f32.mrf.mxu0
    %v1078 = vadd.f32 0.0, %v1077
    %v1079 = vpop.f32.mrf.mxu0
    %v1080 = vadd.f32 0.0, %v1079
    %1081 = vdwg.mxu0
    %1082 = vmatprep.subr.bf16.mxu0 0
    %1083 = vmatpush1.bf16.msra.mxu0 %v198
    %1084 = vmatprep.subr.bf16.mxu0 0
    %1085 = vmatpush1.bf16.msra.mxu0 %v195
    %1086 = vmatprep.subr.bf16.mxu0 0
    %1087 = vmatpush1.bf16.msra.mxu0 %v192
    %1088 = vmatprep.subr.bf16.mxu0 0
    %1089 = vmatpush1.bf16.msra.mxu0 %v189
    %1090 = vmatprep.subr.bf16.mxu0 0
    %1091 = vmatpush1.bf16.msra.mxu0 %v186
    %1092 = vmatprep.subr.bf16.mxu0 0
    %1093 = vmatpush1.bf16.msra.mxu0 %v183
    %1094 = vmatprep.subr.bf16.mxu0 0
    %1095 = vmatpush1.bf16.msra.mxu0 %v180
    %1096 = vmatprep.subr.bf16.mxu0 0
    %1097 = vmatpush1.bf16.msra.mxu0 %v177
    %1098 = vmatprep.subr.bf16.mxu0 0
    %1099 = vmatpush2.bf16.msra.mxu0 0
    %1100 = vmatprep.subr.bf16.mxu0 0
    %1101 = vmatpush2.bf16.msra.mxu0 0
    %1102 = vmatprep.subr.bf16.mxu0 0
    %1103 = vmatpush2.bf16.msra.mxu0 0
    %1104 = vmatprep.subr.bf16.mxu0 0
    %1105 = vmatpush2.bf16.msra.mxu0 0
    %1106 = vmatprep.subr.bf16.mxu0 0
    %1107 = vmatpush2.bf16.msra.mxu0 0
    %1108 = vmatprep.subr.bf16.mxu0 0
    %1109 = vmatpush2.bf16.msra.mxu0 0
    %1110 = vmatprep.subr.bf16.mxu0 0
    %1111 = vmatpush2.bf16.msra.mxu0 0
    %1112 = vmatprep.subr.bf16.mxu0 0
    %1113 = vmatpush2.bf16.msra.mxu0 0
    %1114 = vmatprep.mubr.bf16.mxu0 0
    %1115 = vmatmul.mubr.bf16.gmra.mxu0 %v1038
    %v1116 = vpop.f32.mrf.mxu0
    %v1117 = vadd.f32 0.0, %v1116
    %v1118 = vpop.f32.mrf.mxu0
    %v1119 = vpop.f32.mrf.mxu0
    %v1120 = vadd.f32 0.0, %v1119
    %v1121 = vpop.f32.mrf.mxu0
    %1122 = vdwg.mxu0
    %v1123 = vunpack.c.l.bf16 %v1034
    %v1124 = vunpack.c.l.bf16 %v1036
    %v1125 = vadd.f32 %v1123, %v1074
    %v1126 = vadd.f32 %v1124, %v1078
    %v1127 = vxor.u32 %v1125, 2147483648
    %v1128 = vxor.u32 %v1126, 2147483648
    %v1129 = vmul.f32 %v1127, 1.442695
    %v1130 = vpow.pop %v1129
    %v1131 = vmul.f32 %v1128, 1.442695
    %v1132 = vpow.pop %v1131
    %v1133 = vadd.f32 %v1130, 1.0
    %v1134 = vadd.f32 %v1132, 1.0
    %v1135 = vrcp.pop %v1133
    %v1136 = vmul.f32 1.0, %v1135
    %v1137 = vrcp.pop %v1134
    %v1138 = vmul.f32 1.0, %v1137
    %v1141 = vrot.slane %v1034, 4
    %v1142 = vrot.slane %v1036, 4
    %v1145 = vunpack.c.l.bf16 %v1141
    %v1146 = vunpack.c.l.bf16 %v1142
    %v1147 = vadd.f32 %v1145, %v1076
    %v1148 = vadd.f32 %v1146, %v1080
    %v1149 = vxor.u32 %v1147, 2147483648
    %v1150 = vxor.u32 %v1148, 2147483648
    %v1151 = vmul.f32 %v1149, 1.442695
    %v1152 = vpow.pop %v1151
    %v1153 = vmul.f32 %v1150, 1.442695
    %v1154 = vpow.pop %v1153
    %v1155 = vadd.f32 %v1152, 1.0
    %v1156 = vadd.f32 %v1154, 1.0
    %v1157 = vrcp.pop %v1155
    %v1158 = vmul.f32 1.0, %v1157
    %v1159 = vrcp.pop %v1156
    %v1160 = vmul.f32 1.0, %v1159
    %v1161 = vadd.f32 %v1117, %v349
    %v1162 = vadd.f32 %v1120, %v349
    %v1163 = vmul.f32 %v1136, %v1161
    %v1164 = vmul.f32 %v1138, %v1162
    %v1165 = vunpack.c.l.bf16 %v1035
    %v1166 = vunpack.c.l.bf16 %v1037
    %v1167 = vadd.f32 %v1165, %v1163
    %v1168 = vadd.f32 %v1166, %v1164
    %v1169 = vtanh.pop %v1167
    %v1170 = vtanh.pop %v1168
    %v1171 = vsub.f32 1.0, %v1158
    %v1172 = vsub.f32 1.0, %v1160
    %v1173 = vmul.f32 %v1171, %v1169
    %v1174 = vmul.f32 %v1172, %v1170
    %v1175 = vmul.f32 %v1158, %v1031
    %v1176 = vmul.f32 %v1160, %v1032
    %v1177 = vadd.f32 %v1173, %v1175
    %v1178 = vadd.f32 %v1174, %v1176
    %s1179 = sadd.s32 %s87, 6
    %v1180 = vstv %s1179
    %vm1181 = vcmp.le.s32.totalorder %v1180, %v52
    %vm1182 = vcmp.le.s32.totalorder %v1180, %v53
    %v1183 = vsel %vm1181, 1, 0
    %v1184 = vsel %vm1182, 1, 0
    %1185 = vset.pattern.permute.xlu0 0
    %1186 = vperm.xlu0 %1185, %v1183
    %v1187 = vpop.permute.xlu0 %1186
    %1188 = vset.pattern.permute.xlu0 0
    %1189 = vperm.xlu0 %1188, %v1184
    %v1190 = vpop.permute.xlu0 %1189
    %vm1191 = vcmp.eq.s32.totalorder %v1187, 1
    %vm1192 = vcmp.eq.s32.totalorder %v1190, 1
    %v1193 = vsel %vm1191, %v1177, %v1031
    %v1194 = vsel %vm1192, %v1178, %v1032
    %s1195 = scalar_lea.vmem [#allocation4], 144
    %v1196 = vld [vmem:[%s1195] sm:$0xff]
    %v1197 = vld [vmem:[%s1195 + $0x8] sm:$0xf]
    %v1198 = vld [vmem:[%s1195 + $0xc] sm:$0xff]
    %v1199 = vld [vmem:[%s1195 + $0x14] sm:$0xf]
    %v1200 = vpack.c.bf16 %v1194, %v1193
    %1201 = vmatprep.subr.bf16.mxu0 %v197
    %1202 = vmatpush1.bf16.msra.mxu0 %v196
    %1203 = vmatprep.subr.bf16.mxu0 %v194
    %1204 = vmatpush1.bf16.msra.mxu0 %v193
    %1205 = vmatprep.subr.bf16.mxu0 %v191
    %1206 = vmatpush1.bf16.msra.mxu0 %v190
    %1207 = vmatprep.subr.bf16.mxu0 %v188
    %1208 = vmatpush1.bf16.msra.mxu0 %v187
    %1209 = vmatprep.subr.bf16.mxu0 %v185
    %1210 = vmatpush1.bf16.msra.mxu0 %v184
    %1211 = vmatprep.subr.bf16.mxu0 %v182
    %1212 = vmatpush1.bf16.msra.mxu0 %v181
    %1213 = vmatprep.subr.bf16.mxu0 %v179
    %1214 = vmatpush1.bf16.msra.mxu0 %v178
    %1215 = vmatprep.subr.bf16.mxu0 %v176
    %1216 = vmatpush1.bf16.msra.mxu0 %v175
    %1217 = vmatprep.subr.bf16.mxu0 0
    %1218 = vmatpush2.bf16.msra.mxu0 0
    %1219 = vmatprep.subr.bf16.mxu0 0
    %1220 = vmatpush2.bf16.msra.mxu0 0
    %1221 = vmatprep.subr.bf16.mxu0 0
    %1222 = vmatpush2.bf16.msra.mxu0 0
    %1223 = vmatprep.subr.bf16.mxu0 0
    %1224 = vmatpush2.bf16.msra.mxu0 0
    %1225 = vmatprep.subr.bf16.mxu0 0
    %1226 = vmatpush2.bf16.msra.mxu0 0
    %1227 = vmatprep.subr.bf16.mxu0 0
    %1228 = vmatpush2.bf16.msra.mxu0 0
    %1229 = vmatprep.subr.bf16.mxu0 0
    %1230 = vmatpush2.bf16.msra.mxu0 0
    %1231 = vmatprep.subr.bf16.mxu0 0
    %1232 = vmatpush2.bf16.msra.mxu0 0
    %1233 = vmatprep.mubr.bf16.mxu0 0
    %1234 = vmatmul.mubr.bf16.gmra.mxu0 %v1200
    %v1235 = vpop.f32.mrf.mxu0
    %v1236 = vadd.f32 0.0, %v1235
    %v1237 = vpop.f32.mrf.mxu0
    %v1238 = vadd.f32 0.0, %v1237
    %v1239 = vpop.f32.mrf.mxu0
    %v1240 = vadd.f32 0.0, %v1239
    %v1241 = vpop.f32.mrf.mxu0
    %v1242 = vadd.f32 0.0, %v1241
    %1243 = vdwg.mxu0
    %1244 = vmatprep.subr.bf16.mxu0 0
    %1245 = vmatpush1.bf16.msra.mxu0 %v198
    %1246 = vmatprep.subr.bf16.mxu0 0
    %1247 = vmatpush1.bf16.msra.mxu0 %v195
    %1248 = vmatprep.subr.bf16.mxu0 0
    %1249 = vmatpush1.bf16.msra.mxu0 %v192
    %1250 = vmatprep.subr.bf16.mxu0 0
    %1251 = vmatpush1.bf16.msra.mxu0 %v189
    %1252 = vmatprep.subr.bf16.mxu0 0
    %1253 = vmatpush1.bf16.msra.mxu0 %v186
    %1254 = vmatprep.subr.bf16.mxu0 0
    %1255 = vmatpush1.bf16.msra.mxu0 %v183
    %1256 = vmatprep.subr.bf16.mxu0 0
    %1257 = vmatpush1.bf16.msra.mxu0 %v180
    %1258 = vmatprep.subr.bf16.mxu0 0
    %1259 = vmatpush1.bf16.msra.mxu0 %v177
    %1260 = vmatprep.subr.bf16.mxu0 0
    %1261 = vmatpush2.bf16.msra.mxu0 0
    %1262 = vmatprep.subr.bf16.mxu0 0
    %1263 = vmatpush2.bf16.msra.mxu0 0
    %1264 = vmatprep.subr.bf16.mxu0 0
    %1265 = vmatpush2.bf16.msra.mxu0 0
    %1266 = vmatprep.subr.bf16.mxu0 0
    %1267 = vmatpush2.bf16.msra.mxu0 0
    %1268 = vmatprep.subr.bf16.mxu0 0
    %1269 = vmatpush2.bf16.msra.mxu0 0
    %1270 = vmatprep.subr.bf16.mxu0 0
    %1271 = vmatpush2.bf16.msra.mxu0 0
    %1272 = vmatprep.subr.bf16.mxu0 0
    %1273 = vmatpush2.bf16.msra.mxu0 0
    %1274 = vmatprep.subr.bf16.mxu0 0
    %1275 = vmatpush2.bf16.msra.mxu0 0
    %1276 = vmatprep.mubr.bf16.mxu0 0
    %1277 = vmatmul.mubr.bf16.gmra.mxu0 %v1200
    %v1278 = vpop.f32.mrf.mxu0
    %v1279 = vadd.f32 0.0, %v1278
    %v1280 = vpop.f32.mrf.mxu0
    %v1281 = vpop.f32.mrf.mxu0
    %v1282 = vadd.f32 0.0, %v1281
    %v1283 = vpop.f32.mrf.mxu0
    %1284 = vdwg.mxu0
    %v1285 = vunpack.c.l.bf16 %v1196
    %v1286 = vunpack.c.l.bf16 %v1198
    %v1287 = vadd.f32 %v1285, %v1236
    %v1288 = vadd.f32 %v1286, %v1240
    %v1289 = vxor.u32 %v1287, 2147483648
    %v1290 = vxor.u32 %v1288, 2147483648
    %v1291 = vmul.f32 %v1289, 1.442695
    %v1292 = vpow.pop %v1291
    %v1293 = vmul.f32 %v1290, 1.442695
    %v1294 = vpow.pop %v1293
    %v1295 = vadd.f32 %v1292, 1.0
    %v1296 = vadd.f32 %v1294, 1.0
    %v1297 = vrcp.pop %v1295
    %v1298 = vmul.f32 1.0, %v1297
    %v1299 = vrcp.pop %v1296
    %v1300 = vmul.f32 1.0, %v1299
    %v1303 = vrot.slane %v1196, 4
    %v1304 = vrot.slane %v1198, 4
    %v1307 = vunpack.c.l.bf16 %v1303
    %v1308 = vunpack.c.l.bf16 %v1304
    %v1309 = vadd.f32 %v1307, %v1238
    %v1310 = vadd.f32 %v1308, %v1242
    %v1311 = vxor.u32 %v1309, 2147483648
    %v1312 = vxor.u32 %v1310, 2147483648
    %v1313 = vmul.f32 %v1311, 1.442695
    %v1314 = vpow.pop %v1313
    %v1315 = vmul.f32 %v1312, 1.442695
    %v1316 = vpow.pop %v1315
    %v1317 = vadd.f32 %v1314, 1.0
    %v1318 = vadd.f32 %v1316, 1.0
    %v1319 = vrcp.pop %v1317
    %v1320 = vmul.f32 1.0, %v1319
    %v1321 = vrcp.pop %v1318
    %v1322 = vmul.f32 1.0, %v1321
    %v1323 = vadd.f32 %v1279, %v349
    %v1324 = vadd.f32 %v1282, %v349
    %v1325 = vmul.f32 %v1298, %v1323
    %v1326 = vmul.f32 %v1300, %v1324
    %v1327 = vunpack.c.l.bf16 %v1197
    %v1328 = vunpack.c.l.bf16 %v1199
    %v1329 = vadd.f32 %v1327, %v1325
    %v1330 = vadd.f32 %v1328, %v1326
    %v1331 = vtanh.pop %v1329
    %v1332 = vtanh.pop %v1330
    %v1333 = vsub.f32 1.0, %v1320
    %v1334 = vsub.f32 1.0, %v1322
    %v1335 = vmul.f32 %v1333, %v1331
    %v1336 = vmul.f32 %v1334, %v1332
    %v1337 = vmul.f32 %v1320, %v1193
    %v1338 = vmul.f32 %v1322, %v1194
    %v1339 = vadd.f32 %v1335, %v1337
    %v1340 = vadd.f32 %v1336, %v1338
    %s1341 = sadd.s32 %s87, 7
    %v1342 = vstv %s1341
    %vm1343 = vcmp.le.s32.totalorder %v1342, %v52
    %vm1344 = vcmp.le.s32.totalorder %v1342, %v53
    %v1345 = vsel %vm1343, 1, 0
    %v1346 = vsel %vm1344, 1, 0
    %1347 = vset.pattern.permute.xlu0 0
    %1348 = vperm.xlu0 %1347, %v1345
    %v1349 = vpop.permute.xlu0 %1348
    %1350 = vset.pattern.permute.xlu0 0
    %1351 = vperm.xlu0 %1350, %v1346
    %v1352 = vpop.permute.xlu0 %1351
    %vm1353 = vcmp.eq.s32.totalorder %v1349, 1
    %vm1354 = vcmp.eq.s32.totalorder %v1352, 1
    %v1355 = vsel %vm1353, %v1339, %v1193
    %v1356 = vsel %vm1354, %v1340, %v1194
    %s1357 = scalar_lea.vmem [#allocation4], 168
    %v1358 = vld [vmem:[%s1357] sm:$0xff]
    %v1359 = vld [vmem:[%s1357 + $0x8] sm:$0xf]
    %v1360 = vld [vmem:[%s1357 + $0xc] sm:$0xff]
    %v1361 = vld [vmem:[%s1357 + $0x14] sm:$0xf]
    %v1362 = vpack.c.bf16 %v1356, %v1355
    %1363 = vmatprep.subr.bf16.mxu0 %v197
    %1364 = vmatpush1.bf16.msra.mxu0 %v196
    %1365 = vmatprep.subr.bf16.mxu0 %v194
    %1366 = vmatpush1.bf16.msra.mxu0 %v193
    %1367 = vmatprep.subr.bf16.mxu0 %v191
    %1368 = vmatpush1.bf16.msra.mxu0 %v190
    %1369 = vmatprep.subr.bf16.mxu0 %v188
    %1370 = vmatpush1.bf16.msra.mxu0 %v187
    %1371 = vmatprep.subr.bf16.mxu0 %v185
    %1372 = vmatpush1.bf16.msra.mxu0 %v184
    %1373 = vmatprep.subr.bf16.mxu0 %v182
    %1374 = vmatpush1.bf16.msra.mxu0 %v181
    %1375 = vmatprep.subr.bf16.mxu0 %v179
    %1376 = vmatpush1.bf16.msra.mxu0 %v178
    %1377 = vmatprep.subr.bf16.mxu0 %v176
    %1378 = vmatpush1.bf16.msra.mxu0 %v175
    %1379 = vmatprep.subr.bf16.mxu0 0
    %1380 = vmatpush2.bf16.msra.mxu0 0
    %1381 = vmatprep.subr.bf16.mxu0 0
    %1382 = vmatpush2.bf16.msra.mxu0 0
    %1383 = vmatprep.subr.bf16.mxu0 0
    %1384 = vmatpush2.bf16.msra.mxu0 0
    %1385 = vmatprep.subr.bf16.mxu0 0
    %1386 = vmatpush2.bf16.msra.mxu0 0
    %1387 = vmatprep.subr.bf16.mxu0 0
    %1388 = vmatpush2.bf16.msra.mxu0 0
    %1389 = vmatprep.subr.bf16.mxu0 0
    %1390 = vmatpush2.bf16.msra.mxu0 0
    %1391 = vmatprep.subr.bf16.mxu0 0
    %1392 = vmatpush2.bf16.msra.mxu0 0
    %1393 = vmatprep.subr.bf16.mxu0 0
    %1394 = vmatpush2.bf16.msra.mxu0 0
    %1395 = vmatprep.mubr.bf16.mxu0 0
    %1396 = vmatmul.mubr.bf16.gmra.mxu0 %v1362
    %v1397 = vpop.f32.mrf.mxu0
    %v1398 = vadd.f32 0.0, %v1397
    %v1399 = vpop.f32.mrf.mxu0
    %v1400 = vadd.f32 0.0, %v1399
    %v1401 = vpop.f32.mrf.mxu0
    %v1402 = vadd.f32 0.0, %v1401
    %v1403 = vpop.f32.mrf.mxu0
    %v1404 = vadd.f32 0.0, %v1403
    %1405 = vdwg.mxu0
    %1406 = vmatprep.subr.bf16.mxu0 0
    %1407 = vmatpush1.bf16.msra.mxu0 %v198
    %1408 = vmatprep.subr.bf16.mxu0 0
    %1409 = vmatpush1.bf16.msra.mxu0 %v195
    %1410 = vmatprep.subr.bf16.mxu0 0
    %1411 = vmatpush1.bf16.msra.mxu0 %v192
    %1412 = vmatprep.subr.bf16.mxu0 0
    %1413 = vmatpush1.bf16.msra.mxu0 %v189
    %1414 = vmatprep.subr.bf16.mxu0 0
    %1415 = vmatpush1.bf16.msra.mxu0 %v186
    %1416 = vmatprep.subr.bf16.mxu0 0
    %1417 = vmatpush1.bf16.msra.mxu0 %v183
    %1418 = vmatprep.subr.bf16.mxu0 0
    %1419 = vmatpush1.bf16.msra.mxu0 %v180
    %1420 = vmatprep.subr.bf16.mxu0 0
    %1421 = vmatpush1.bf16.msra.mxu0 %v177
    %1422 = vmatprep.subr.bf16.mxu0 0
    %1423 = vmatpush2.bf16.msra.mxu0 0
    %1424 = vmatprep.subr.bf16.mxu0 0
    %1425 = vmatpush2.bf16.msra.mxu0 0
    %1426 = vmatprep.subr.bf16.mxu0 0
    %1427 = vmatpush2.bf16.msra.mxu0 0
    %1428 = vmatprep.subr.bf16.mxu0 0
    %1429 = vmatpush2.bf16.msra.mxu0 0
    %1430 = vmatprep.subr.bf16.mxu0 0
    %1431 = vmatpush2.bf16.msra.mxu0 0
    %1432 = vmatprep.subr.bf16.mxu0 0
    %1433 = vmatpush2.bf16.msra.mxu0 0
    %1434 = vmatprep.subr.bf16.mxu0 0
    %1435 = vmatpush2.bf16.msra.mxu0 0
    %1436 = vmatprep.subr.bf16.mxu0 0
    %1437 = vmatpush2.bf16.msra.mxu0 0
    %1438 = vmatprep.mubr.bf16.mxu0 0
    %1439 = vmatmul.mubr.bf16.gmra.mxu0 %v1362
    %v1440 = vpop.f32.mrf.mxu0
    %v1441 = vadd.f32 0.0, %v1440
    %v1442 = vpop.f32.mrf.mxu0
    %v1443 = vpop.f32.mrf.mxu0
    %v1444 = vadd.f32 0.0, %v1443
    %v1445 = vpop.f32.mrf.mxu0
    %1446 = vdwg.mxu0
    %v1447 = vunpack.c.l.bf16 %v1358
    %v1448 = vunpack.c.l.bf16 %v1360
    %v1449 = vadd.f32 %v1447, %v1398
    %v1450 = vadd.f32 %v1448, %v1402
    %v1451 = vxor.u32 %v1449, 2147483648
    %v1452 = vxor.u32 %v1450, 2147483648
    %v1453 = vmul.f32 %v1451, 1.442695
    %v1454 = vpow.pop %v1453
    %v1455 = vmul.f32 %v1452, 1.442695
    %v1456 = vpow.pop %v1455
    %v1457 = vadd.f32 %v1454, 1.0
    %v1458 = vadd.f32 %v1456, 1.0
    %v1459 = vrcp.pop %v1457
    %v1460 = vmul.f32 1.0, %v1459
    %v1461 = vrcp.pop %v1458
    %v1462 = vmul.f32 1.0, %v1461
    %v1465 = vrot.slane %v1358, 4
    %v1466 = vrot.slane %v1360, 4
    %v1469 = vunpack.c.l.bf16 %v1465
    %v1470 = vunpack.c.l.bf16 %v1466
    %v1471 = vadd.f32 %v1469, %v1400
    %v1472 = vadd.f32 %v1470, %v1404
    %v1473 = vxor.u32 %v1471, 2147483648
    %v1474 = vxor.u32 %v1472, 2147483648
    %v1475 = vmul.f32 %v1473, 1.442695
    %v1476 = vpow.pop %v1475
    %v1477 = vmul.f32 %v1474, 1.442695
    %v1478 = vpow.pop %v1477
    %v1479 = vadd.f32 %v1476, 1.0
    %v1480 = vadd.f32 %v1478, 1.0
    %v1481 = vrcp.pop %v1479
    %v1482 = vmul.f32 1.0, %v1481
    %v1483 = vrcp.pop %v1480
    %v1484 = vmul.f32 1.0, %v1483
    %v1485 = vadd.f32 %v1441, %v349
    %v1486 = vadd.f32 %v1444, %v349
    %v1487 = vmul.f32 %v1460, %v1485
    %v1488 = vmul.f32 %v1462, %v1486
    %v1489 = vunpack.c.l.bf16 %v1359
    %v1490 = vunpack.c.l.bf16 %v1361
    %v1491 = vadd.f32 %v1489, %v1487
    %v1492 = vadd.f32 %v1490, %v1488
    %v1493 = vtanh.pop %v1491
    %v1494 = vtanh.pop %v1492
    %v1495 = vsub.f32 1.0, %v1482
    %v1496 = vsub.f32 1.0, %v1484
    %v1497 = vmul.f32 %v1495, %v1493
    %v1498 = vmul.f32 %v1496, %v1494
    %v1499 = vmul.f32 %v1482, %v1355
    %v1500 = vmul.f32 %v1484, %v1356
    %v1501 = vadd.f32 %v1497, %v1499
    %v1502 = vadd.f32 %v1498, %v1500
    %s1503 = sadd.s32 %s87, 8
    %v1504 = vstv %s1503
    %vm1505 = vcmp.le.s32.totalorder %v1504, %v52
    %vm1506 = vcmp.le.s32.totalorder %v1504, %v53
    %v1507 = vsel %vm1505, 1, 0
    %v1508 = vsel %vm1506, 1, 0
    %1509 = vset.pattern.permute.xlu0 0
    %1510 = vperm.xlu0 %1509, %v1507
    %v1511 = vpop.permute.xlu0 %1510
    %1512 = vset.pattern.permute.xlu0 0
    %1513 = vperm.xlu0 %1512, %v1508
    %v1514 = vpop.permute.xlu0 %1513
    %vm1515 = vcmp.eq.s32.totalorder %v1511, 1
    %vm1516 = vcmp.eq.s32.totalorder %v1514, 1
    %v1517 = vsel %vm1515, %v1501, %v1355
    %v1518 = vsel %vm1516, %v1502, %v1356
    %1519 = vst [vmem:[#allocation7] sm:$0xff] %v1517
    %1520 = vst [vmem:[#allocation7 + $0x8] sm:$0xff] %v1518
    // Predicated region
    $region26: #{tpu_custom_call.1} parent=1 // pred_check
      _
    $region27: #{tpu_custom_call.1} parent=1 // pred_check_branch
      %1522 = sbr.rel (0) target = $region29
    $region28: #{tpu_custom_call.1} parent=1 // pred_region
      %s1524 = ssub.s32 256, 256
      %1525 = vsyncadd [#allocation6], %s1524
      %s1526 = sshll.u32 [#allocation7], 4
      %s1527 = int_to_ptr.vmem [resolvable:$true] %s1526
      %1532 = dma.vmem_to_hbm [thread:$0]  %s1527, 256, %s4, [#allocation6], 128, 128, 8
    $region29: #{tpu_custom_call.1} parent=1 // pred_fallthru
      _
    // Predicated region
    $region30: #{tpu_custom_call.1} parent=1 // pred_check
      _
    $region31: #{tpu_custom_call.1} parent=1 // pred_check_branch
      %1534 = sbr.rel (0) target = $region33
    $region32: #{tpu_custom_call.1} parent=1 // pred_region
      %1535 = dma.done [#allocation6], 256
    $region33: #{tpu_custom_call.1} parent=1 // pred_fallthru
      _
    %1536 = vsyncpa [#allocation5], 1
    %1537 = vsyncpa [#allocation6], 1
  %1538 = vsyncmov [#allocation3]
  %s1539 = vpop.sfrf %1538
  %p1540 = scmp.eq.s32.totalorder %s1539, 0
  %p1541 = pneg %p1540
  %1543 = shalt.err (%p1541)

</llo_original>
